<compile_context>
chip_gen: v6e
topology: v6e:2x2x1
jax: 0.10.0
libtpu: 0.0.40
codegen_flags: <defaults>
</compile_context>

<pallas_src>
import functools

import jax
import jax.numpy as jnp
from jax.experimental import pallas as pl
from jax.experimental.pallas import tpu as pltpu

LANE = 128


def _round_up(x, m):
    return ((x + m - 1) // m) * m


def _vmem_limit_bytes():
    """Generation-aware VMEM budget (~80% of physical capacity); safe fallback."""
    try:
        cap = int(getattr(pltpu.get_tpu_info(), "vmem_capacity_bytes", 0))
        if cap > 0:
            return int(cap * 0.8)
    except Exception:
        pass
    return 48 * 1024 * 1024


def _choose_tm(n_pad, c_in_p, c_out_p, out_itemsize, vmem_limit):
    """Largest row-stripe height tm whose pipeline fits the VMEM budget while keeping
    >= 2 row tiles in the grid (so both v7x TensorCores get work)."""
    resident = 2 * (n_pad * c_in_p * 2            # X (bf16, double buffered)
                    + c_in_p * c_out_p * 2        # W (bf16)
                    + c_out_p * 4)                # bias (f32)
    resident += n_pad * c_out_p * (4 + 2)         # in-kernel Z intermediate (f32 + bf16)
    budget = int(vmem_limit * 0.85) - resident
    for tm in (1024, 512, 256, 128, 64, 32, 16, 8):
        if n_pad % tm != 0 or n_pad // tm < 2:
            continue
        per_step = 2 * tm * n_pad * 2 + 2 * tm * c_out_p * out_itemsize
        if per_step <= budget:
            return tm
    return 8


# ------------------- fused layer: Y = act(A_hat @ (X @ W) + b) -------------------
def gcn_layer_kernel(a_ref, x_ref, w_ref, b_ref, o_ref, *, apply_relu):
    """One full A_hat row stripe of  act(A_hat @ (X @ W) + b).

    a_ref : [TM, N_pad]       bf16  streamed adjacency row stripe
    x_ref : [N_pad, C_in_p]   bf16  resident node features
    w_ref : [C_in_p, C_out_p] bf16  resident layer weight
    b_ref : [1, C_out_p]      f32   resident bias
    o_ref : [TM, C_out_p]           output row stripe (bf16 hidden / f32 logits)
    """
    # Z = X @ W recomputed per stripe: MXU has slack; avoids a Z HBM round trip and a
    # cross-core scratch-initialisation hazard under megacore row sharding.
    z = jnp.dot(x_ref[...], w_ref[...],
                preferred_element_type=jnp.float32).astype(jnp.bfloat16)
    out = jnp.dot(a_ref[...], z, preferred_element_type=jnp.float32) + b_ref[...]
    if apply_relu:
        out = jnp.maximum(out, 0.0)   # Dropout is identity in inference mode
    o_ref[...] = out.astype(o_ref.dtype)


def gcn_layer(a_bf16, x_bf16, w_bf16, bias_f32, *, apply_relu, out_dtype, vmem_limit):
    n_pad = a_bf16.shape[0]
    c_in_p = x_bf16.shape[1]
    c_out_p = w_bf16.shape[1]
    out_itemsize = jnp.dtype(out_dtype).itemsize

    tm = _choose_tm(n_pad, c_in_p, c_out_p, out_itemsize, vmem_limit)
    n_i = n_pad // tm

    cost = pl.CostEstimate(
        flops=2 * n_pad * n_pad * c_out_p + 2 * n_i * n_pad * c_in_p * c_out_p,
        transcendentals=0,
        bytes_accessed=(a_bf16.size * 2 + x_bf16.size * 2 + w_bf16.size * 2
                        + bias_f32.size * 4 + n_pad * c_out_p * out_itemsize),
    )

    kernel = functools.partial(gcn_layer_kernel, apply_relu=apply_relu)
    return pl.pallas_call(
        kernel,
        out_shape=jax.ShapeDtypeStruct((n_pad, c_out_p), out_dtype),
        grid=(n_i,),
        in_specs=[
            pl.BlockSpec((tm, n_pad), lambda i: (i, 0)),        # streamed A_hat stripe
            pl.BlockSpec((n_pad, c_in_p), lambda i: (0, 0)),    # resident X
            pl.BlockSpec((c_in_p, c_out_p), lambda i: (0, 0)),  # resident W
            pl.BlockSpec((1, c_out_p), lambda i: (0, 0)),       # resident bias
        ],
        out_specs=pl.BlockSpec((tm, c_out_p), lambda i: (i, 0)),
        compiler_params=pltpu.CompilerParams(
            dimension_semantics=("parallel",),   # row stripes shard across TCs (v7x)
            vmem_limit_bytes=vmem_limit,
        ),
        cost_estimate=cost,
    )(a_bf16, x_bf16, w_bf16, bias_f32)


# ------------------------------- glue / wrapper -------------------------------
def build_normalized_adjacency(edge_index, num_nodes, n_pad=None):
    """A_hat = D^-1/2 (A + I) D^-1/2 matching PyG gcn_norm (add_remaining_self_loops):
    duplicate edges are summed; existing self-loops are replaced by exactly one unit
    self-loop per node.  Built directly at padded size; padded rows/cols stay zero."""
    if n_pad is None:
        n_pad = num_nodes
    src, dst = edge_index[0], edge_index[1]
    w = (src != dst).astype(jnp.float32)       # drop pre-existing self-loop edges
    adj = jnp.zeros((n_pad, n_pad), jnp.float32)
    adj = adj.at[dst, src].add(w)              # message flows src -> dst (row = dst)
    idx = jnp.arange(num_nodes)
    adj = adj.at[idx, idx].set(1.0)            # exactly one self-loop per real node
    deg = jnp.sum(adj, axis=1)
    d_inv_sqrt = jnp.where(deg > 0, jax.lax.rsqrt(deg), 0.0)
    return adj * d_inv_sqrt[:, None] * d_inv_sqrt[None, :]


def gnn_model_forward(x, edge_index, params):
    """Pallas implementation of GNNModel.forward (GCN, num_layers=2, inference)."""
    n, c_in = x.shape
    c_hid = params["w1"].shape[1]
    c_out = params["w2"].shape[1]

    n_pad = max(512, _round_up(n, 256))   # >= 2 row tiles so both v7x TCs get work
    c_in_p = _round_up(c_in, LANE)
    c_hid_p = _round_up(c_hid, LANE)
    c_out_p = _round_up(c_out, LANE)
    vmem_limit = _vmem_limit_bytes()

    # Dense normalised adjacency (glue), built at padded shape, cast to bf16 (MXU).
    a_pad = build_normalized_adjacency(edge_index, n, n_pad).astype(jnp.bfloat16)

    # Lane-pad features / weights / biases (zero padding is exact for this math).
    x_pad = jnp.pad(x.astype(jnp.bfloat16), ((0, n_pad - n), (0, c_in_p - c_in)))
    w1_p = jnp.pad(params["w1"].astype(jnp.bfloat16),
                   ((0, c_in_p - c_in), (0, c_hid_p - c_hid)))
    b1_p = jnp.pad(params["b1"].astype(jnp.float32), ((0, 0), (0, c_hid_p - c_hid)))
    w2_p = jnp.pad(params["w2"].astype(jnp.bfloat16),
                   ((0, c_hid_p - c_hid), (0, c_out_p - c_out)))
    b2_p = jnp.pad(params["b2"].astype(jnp.float32), ((0, 0), (0, c_out_p - c_out)))

    # Layer 1: H = relu(A_hat @ (X @ W1) + b1)   (Dropout = identity in eval)
    # Padded rows of H equal relu(b1); harmless because A_hat's padded columns are 0.
    h = gcn_layer(a_pad, x_pad, w1_p, b1_p,
                  apply_relu=True, out_dtype=jnp.bfloat16, vmem_limit=vmem_limit)

    # Layer 2: logits = A_hat @ (H @ W2) + b2
    out = gcn_layer(a_pad, h, w2_p, b2_p,
                    apply_relu=False, out_dtype=jnp.float32, vmem_limit=vmem_limit)

    return out[:n, :c_out]


def init_params(key, c_in, c_hidden, c_out):
    """Deterministic glorot-uniform weights + zero biases (PyG GCNConv default)."""
    k1, k2 = jax.random.split(key)

    def glorot(k, shape):
        limit = jnp.sqrt(6.0 / (shape[0] + shape[1]))
        return jax.random.uniform(k, shape, jnp.float32, -limit, limit)

    return {
        "w1": glorot(k1, (c_in, c_hidden)),
        "b1": jnp.zeros((1, c_hidden), jnp.float32),
        "w2": glorot(k2, (c_hidden, c_out)),
        "b2": jnp.zeros((1, c_out), jnp.float32),
    }


if __name__ == "__main__":
    # Small synthetic graph consistent with GNNModel(c_in=8, c_hidden=32, c_out=4)
    N, C_IN, C_HID, C_OUT, E = 16, 8, 32, 4, 40

    key = jax.random.PRNGKey(0)
    k_x, k_e, k_p = jax.random.split(key, 3)

    x = jax.random.normal(k_x, (N, C_IN), jnp.float32)
    # random directed edges (PyG notation: row 0 = source, row 1 = target)
    edge_index = jax.random.randint(k_e, (2, E), 0, N, jnp.int32)

    params = init_params(k_p, C_IN, C_HID, C_OUT)

    out = gnn_model_forward(x, edge_index, params)
    out = jax.block_until_ready(out)

    # sanity: pure-JAX f32 reference of the same math (kernel uses bf16 MXU inputs,
    # so compare with a loose tolerance)
    a_hat = build_normalized_adjacency(edge_index, N)
    h_ref = jnp.maximum(a_hat @ (x @ params["w1"]) + params["b1"], 0.0)
    ref = a_hat @ (h_ref @ params["w2"]) + params["b2"]
    assert out.shape == (N, C_OUT)
    assert jnp.allclose(out, ref, atol=5e-2, rtol=5e-2), float(
        jnp.max(jnp.abs(out - ref)))

    print("KERNEL_OK")
</pallas_src>

<mosaic_0001>
module attributes {stable_mosaic.version = 11 : i64} {
  func.func @gcn_layer_kernel(%arg0: i32, %arg1: memref<256x512xbf16, #tpu.memory_space<vmem>>, %arg2: memref<512x128xbf16, #tpu.memory_space<vmem>>, %arg3: memref<128x128xbf16, #tpu.memory_space<vmem>>, %arg4: memref<1x128xf32, #tpu.memory_space<vmem>>, %arg5: memref<256x128xbf16, #tpu.memory_space<vmem>>) attributes {dimension_semantics = [#tpu.dimension_semantics<parallel>], iteration_bounds = array<i64: 2>, scalar_prefetch = 0 : i64, scratch_operands = 0 : i64, tpu.core_type = #tpu.core_type<tc>, window_params = [{transform_indices = @transform_0, window_bounds = array<i64: 256, 512>}, {pipeline_mode = #tpu.pipeline_mode<synchronous>, transform_indices = @transform_1, window_bounds = array<i64: 512, 128>}, {pipeline_mode = #tpu.pipeline_mode<synchronous>, transform_indices = @transform_2, window_bounds = array<i64: 128, 128>}, {pipeline_mode = #tpu.pipeline_mode<synchronous>, transform_indices = @transform_3, window_bounds = array<i64: 1, 128>}, {transform_indices = @transform_4, window_bounds = array<i64: 256, 128>}]} {
    %c0 = arith.constant 0 : index
    %c0_0 = arith.constant 0 : index
    %0 = vector.load %arg2[%c0, %c0_0] : memref<512x128xbf16, #tpu.memory_space<vmem>>, vector<512x128xbf16>
    %c0_1 = arith.constant 0 : index
    %c0_2 = arith.constant 0 : index
    %1 = vector.load %arg3[%c0_1, %c0_2] : memref<128x128xbf16, #tpu.memory_space<vmem>>, vector<128x128xbf16>
    %cst = arith.constant dense<0.000000e+00> : vector<512x128xf32>
    %2 = tpu.matmul %0, %1, %cst {dimension_numbers = #tpu.dot_dimension_numbers<[1], [0], [0], [1], [0, 0, 1, 1], [], []>} : vector<512x128xbf16>, vector<128x128xbf16>, vector<512x128xf32> -> vector<512x128xf32>
    %3 = arith.truncf %2 : vector<512x128xf32> to vector<512x128xbf16>
    %c0_3 = arith.constant 0 : index
    %c0_4 = arith.constant 0 : index
    %4 = vector.load %arg1[%c0_3, %c0_4] : memref<256x512xbf16, #tpu.memory_space<vmem>>, vector<256x512xbf16>
    %cst_5 = arith.constant dense<0.000000e+00> : vector<256x128xf32>
    %5 = tpu.matmul %4, %3, %cst_5 {dimension_numbers = #tpu.dot_dimension_numbers<[1], [0], [0], [1], [0, 0, 1, 1], [], []>} : vector<256x512xbf16>, vector<512x128xbf16>, vector<256x128xf32> -> vector<256x128xf32>
    %c0_6 = arith.constant 0 : index
    %c0_7 = arith.constant 0 : index
    %6 = vector.load %arg4[%c0_6, %c0_7] : memref<1x128xf32, #tpu.memory_space<vmem>>, vector<1x128xf32>
    %7 = vector.broadcast %6 : vector<1x128xf32> to vector<256x128xf32>
    %8 = arith.addf %5, %7 : vector<256x128xf32>
    %cst_8 = arith.constant 0.000000e+00 : f32
    %9 = vector.broadcast %cst_8 : f32 to vector<256x128xf32>
    %10 = arith.maximumf %8, %9 : vector<256x128xf32>
    %11 = arith.truncf %10 : vector<256x128xf32> to vector<256x128xbf16>
    %c0_9 = arith.constant 0 : index
    %c0_10 = arith.constant 0 : index
    %12 = vector.load %arg5[%c0_9, %c0_10] : memref<256x128xbf16, #tpu.memory_space<vmem>>, vector<256x128xbf16>
    tpu.vector_store %arg5[%c0_9, %c0_10], %11 {strides = array<i32>} : memref<256x128xbf16, #tpu.memory_space<vmem>>, vector<256x128xbf16>,
    return
  }
  func.func @transform_0(%arg0: i32) -> (i32, i32) {
    %c0_i32 = arith.constant 0 : i32
    %c0_i32_0 = arith.constant 0 : i32
    return %arg0, %c0_i32 : i32, i32
  }
  func.func @transform_1(%arg0: i32) -> (i32, i32) {
    %c0_i32 = arith.constant 0 : i32
    %c0_i32_0 = arith.constant 0 : i32
    %c0_i32_1 = arith.constant 0 : i32
    return %c0_i32, %c0_i32_0 : i32, i32
  }
  func.func @transform_2(%arg0: i32) -> (i32, i32) {
    %c0_i32 = arith.constant 0 : i32
    %c0_i32_0 = arith.constant 0 : i32
    %c0_i32_1 = arith.constant 0 : i32
    return %c0_i32, %c0_i32_0 : i32, i32
  }
  func.func @transform_3(%arg0: i32) -> (i32, i32) {
    %c0_i32 = arith.constant 0 : i32
    %c0_i32_0 = arith.constant 0 : i32
    %c0_i32_1 = arith.constant 0 : i32
    return %c0_i32, %c0_i32_0 : i32, i32
  }
  func.func @transform_4(%arg0: i32) -> (i32, i32) {
    %c0_i32 = arith.constant 0 : i32
    %c0_i32_0 = arith.constant 0 : i32
    return %arg0, %c0_i32 : i32, i32
  }
}

</mosaic_0001>

<llo_original>
// kernel: tpu_custom_call.1
$region0: #{tpu_custom_call.1}
  #allocation0 [shape = 'u32[]', space=smem, size = 0x4, offset = 0x4, fixed_abs, tag = 'smem constant byte address 0x4 - core index']
  #allocation1 [shape = 'u32[144,128]{1,0:T(1,128)}', space=vmem, size = 0x12000, scoped, tag = 'internal scratch']
  %s0 = inlined_call_operand.hbm [shape: bf16[512,512], index: 0, kind: input, shape index: {}]
  %s1 = inlined_call_operand.hbm [shape: bf16[512,128], index: 1, kind: input, shape index: {}]
  %s2 = inlined_call_operand.hbm [shape: bf16[128,128], index: 2, kind: input, shape index: {}]
  %s3 = inlined_call_operand.vmem [shape: f32[1,128], index: 3, kind: input, shape index: {}]
  %s4 = inlined_call_operand.hbm [shape: bf16[512,128], index: 4, kind: output, shape index: {}]
  %s5 = sld [smem:[#allocation0]]
  $region61: #{tpu_custom_call.1} parent=0
    _
  %s7 = ssub.s32 1, %s5
  %s8 = scalar_select 0, %s7, %s5
  $region1: #{tpu_custom_call.1} parent=0
    #allocation2 [shape = 'u8[524288]{0}', space=vmem, size = 0x80000, scoped, tag = 'input window, operand 0']
    #allocation3 [shape = 's32[2]{0}', space=sflag, size = 0x8, scoped, tag = 'scoped memory for tpu_custom_call.1']
    #allocation4 [shape = 's32[2]{0}', space=sflag, size = 0x8, scoped, tag = 'scoped memory for tpu_custom_call.1']
    #allocation5 [shape = 'u8[131072]{0}', space=vmem, size = 0x20000, scoped, tag = 'input window, operand 1, single buffered']
    #allocation6 [shape = 's32[1]{0}', space=sflag, size = 0x4, scoped, tag = 'scoped memory for tpu_custom_call.1']
    #allocation7 [shape = 'u8[32768]{0}', space=vmem, size = 0x8000, scoped, tag = 'input window, operand 2, single buffered']
    #allocation8 [shape = 'u8[131072]{0}', space=vmem, size = 0x20000, scoped, tag = 'output window, operand 0']
    %9 = vsyncpa [#allocation3], 0
    %s10 = scalar_lea.sflag [#allocation3], 1
    %11 = vsyncpa %s10, 0
    %12 = vsyncpa [#allocation6], 0
    %13 = vsyncpa [#allocation4], 0
    %s14 = scalar_lea.sflag [#allocation4], 1
    %15 = vsyncpa %s14, 0
    loop: start=0, step=1, limit=4
    $region2: #{tpu_custom_call.1} parent=1 // loop_pre_header
      _
    $region3: #{tpu_custom_call.1} parent=1 // loop_header
      %s17 = sphi 0, %s21
      %p18 = scmp.ge.s32.totalorder %s17, 4
      %s27 = sphi 0, %s29
      %s30 = sphi 0, %s27
      %s31 = sphi 0, %s30
      %s47 = sphi 0, %s31
      %s51 = sphi 0, %s51
      %s53 = sphi 0, %s51
      %s54 = sphi 0, %s53
      %s68 = sphi 0, %s54
      %s72 = sphi 0, %s72
      %s74 = sphi 0, %s72
      %s75 = sphi 0, %s74
      %s89 = sphi 0, %s75
      %s93 = sphi 0, %s93
      %s95 = sphi 0, %s93
      %s96 = sphi 0, %s95
      %s110 = sphi 0, %s96
      %s116 = sphi 0, %s118
      %s119 = sphi 0, %s116
      %s120 = sphi 0, %s119
      %s136 = sphi 0, %s120
    $region4: #{tpu_custom_call.1} parent=1 // loop_header_branch
      %20 = sbr.rel (%p18) target = $region8
    $region5: #{tpu_custom_call.1} parent=1 // loop_body
      %s22 = ssub.s32 %s17, 1
      %s23 = ssub.s32 %s17, 2
      %s24 = sadd.s32 %s17, 1
      %s25 = ssub.s32 %s17, %s24
      %p26 = scmp.eq.s32.totalorder %s25, 0
      %s28 = sadd.s32 %s27, 1
      %s29 = scalar_select %p26, %s27, %s28
      %p32 = pneg %p26
      %p33 = scmp.eq.s32.totalorder %s17, 1
      %p34 = por %p32, %p33
      %p35 = scmp.ne.s32.totalorder %s27, %s30
      %p36 = scmp.eq.s32.totalorder %s17, 0
      %p37 = por %p35, %p36
      %p38 = scmp.ne.s32.totalorder %s27, %s30
      %p39 = scmp.eq.s32.totalorder %s22, 1
      %p40 = por %p38, %p39
      %p41 = scmp.ne.s32.totalorder %s30, %s31
      %p42 = scmp.eq.s32.totalorder %s22, 0
      %p43 = por %p41, %p42
      %p44 = scmp.ne.s32.totalorder %s30, %s31
      %p45 = scmp.eq.s32.totalorder %s23, 1
      %p46 = por %p44, %p45
      %p48 = scmp.ne.s32.totalorder %s31, %s47
      %p49 = scmp.eq.s32.totalorder %s23, 0
      %p50 = por %p48, %p49
      %s52 = sadd.s32 %s51, 1
      %p55 = scmp.eq.s32.totalorder %s17, 1
      %p56 = scmp.ne.s32.totalorder %s51, %s53
      %p57 = scmp.eq.s32.totalorder %s17, 0
      %p58 = por %p56, %p57
      %p59 = scmp.ne.s32.totalorder %s51, %s53
      %p60 = scmp.eq.s32.totalorder %s22, 1
      %p61 = por %p59, %p60
      %p62 = scmp.ne.s32.totalorder %s53, %s54
      %p63 = scmp.eq.s32.totalorder %s22, 0
      %p64 = por %p62, %p63
      %p65 = scmp.ne.s32.totalorder %s53, %s54
      %p66 = scmp.eq.s32.totalorder %s23, 1
      %p67 = por %p65, %p66
      %p69 = scmp.ne.s32.totalorder %s54, %s68
      %p70 = scmp.eq.s32.totalorder %s23, 0
      %p71 = por %p69, %p70
      %s73 = sadd.s32 %s72, 1
      %p76 = scmp.eq.s32.totalorder %s17, 1
      %p77 = scmp.ne.s32.totalorder %s72, %s74
      %p78 = scmp.eq.s32.totalorder %s17, 0
      %p79 = por %p77, %p78
      %p80 = scmp.ne.s32.totalorder %s72, %s74
      %p81 = scmp.eq.s32.totalorder %s22, 1
      %p82 = por %p80, %p81
      %p83 = scmp.ne.s32.totalorder %s74, %s75
      %p84 = scmp.eq.s32.totalorder %s22, 0
      %p85 = por %p83, %p84
      %p86 = scmp.ne.s32.totalorder %s74, %s75
      %p87 = scmp.eq.s32.totalorder %s23, 1
      %p88 = por %p86, %p87
      %p90 = scmp.ne.s32.totalorder %s75, %s89
      %p91 = scmp.eq.s32.totalorder %s23, 0
      %p92 = por %p90, %p91
      %s94 = sadd.s32 %s93, 1
      %p97 = scmp.eq.s32.totalorder %s17, 1
      %p98 = scmp.ne.s32.totalorder %s93, %s95
      %p99 = scmp.eq.s32.totalorder %s17, 0
      %p100 = por %p98, %p99
      %p101 = scmp.ne.s32.totalorder %s93, %s95
      %p102 = scmp.eq.s32.totalorder %s22, 1
      %p103 = por %p101, %p102
      %p104 = scmp.ne.s32.totalorder %s95, %s96
      %p105 = scmp.eq.s32.totalorder %s22, 0
      %p106 = por %p104, %p105
      %p107 = scmp.ne.s32.totalorder %s95, %s96
      %p108 = scmp.eq.s32.totalorder %s23, 1
      %p109 = por %p107, %p108
      %p111 = scmp.ne.s32.totalorder %s96, %s110
      %p112 = scmp.eq.s32.totalorder %s23, 0
      %p113 = por %p111, %p112
      %s114 = ssub.s32 %s17, %s24
      %p115 = scmp.eq.s32.totalorder %s114, 0
      %s117 = sadd.s32 %s116, 1
      %s118 = scalar_select %p115, %s116, %s117
      %p121 = pneg %p115
      %p122 = scmp.eq.s32.totalorder %s17, 1
      %p123 = por %p121, %p122
      %p124 = scmp.ne.s32.totalorder %s116, %s119
      %p125 = scmp.eq.s32.totalorder %s17, 0
      %p126 = por %p124, %p125
      %p127 = scmp.ne.s32.totalorder %s116, %s119
      %p128 = scmp.eq.s32.totalorder %s22, 1
      %p129 = por %p127, %p128
      %p130 = scmp.ne.s32.totalorder %s119, %s120
      %p131 = scmp.eq.s32.totalorder %s22, 0
      %p132 = por %p130, %p131
      %p133 = scmp.ne.s32.totalorder %s119, %s120
      %p134 = scmp.eq.s32.totalorder %s23, 1
      %p135 = por %p133, %p134
      %p137 = scmp.ne.s32.totalorder %s120, %s136
      %p138 = scmp.eq.s32.totalorder %s23, 0
      %p139 = por %p137, %p138
      %p140 = scmp.le.s32.totalorder 1, %s17
      %p141 = scmp.lt.s32.totalorder %s17, 3
      %p142 = pnand %p140, %p141
      %p143 = pneg %p142
      // Predicated region
      $region9: #{tpu_custom_call.1} parent=5 // pred_check
        _
      $region10: #{tpu_custom_call.1} parent=5 // pred_check_branch
        %145 = sbr.rel (%p142) target = $region12
      $region11: #{tpu_custom_call.1} parent=5 // pred_region
        %s146 = ssub.s32 %s17, 1
        // Predicated region
        $region13: #{tpu_custom_call.1} parent=11 // pred_check
          %p147 = pneg %p64
        $region14: #{tpu_custom_call.1} parent=11 // pred_check_branch
          %149 = sbr.rel (%p147) target = $region16
        $region15: #{tpu_custom_call.1} parent=11 // pred_region
          %s151 = ssub.s32 4096, 4096
          %152 = vsyncadd [#allocation6], %s151
          %s153 = sshll.u32 [#allocation5], 4
          %s154 = int_to_ptr.vmem [resolvable:$true] %s153
          %159 = dma.hbm_to_vmem [thread:$0]  %s1, 4096, %s154, [#allocation6], 64, 64, 4
        $region16: #{tpu_custom_call.1} parent=11 // pred_fallthru
          _
        // Predicated region
        $region17: #{tpu_custom_call.1} parent=11 // pred_check
          %p160 = pneg %p85
        $region18: #{tpu_custom_call.1} parent=11 // pred_check_branch
          %162 = sbr.rel (%p160) target = $region20
        $region19: #{tpu_custom_call.1} parent=11 // pred_region
          %s164 = ssub.s32 1024, 1024
          %165 = vsyncadd [#allocation6], %s164
          %s166 = sshll.u32 [#allocation7], 4
          %s167 = int_to_ptr.vmem [resolvable:$true] %s166
          %172 = dma.hbm_to_vmem [thread:$0]  %s2, 1024, %s167, [#allocation6], 64, 64, 4
        $region20: #{tpu_custom_call.1} parent=11 // pred_fallthru
          _
        // Predicated region
        $region21: #{tpu_custom_call.1} parent=11 // pred_check
          %p173 = pneg %p106
        $region22: #{tpu_custom_call.1} parent=11 // pred_check_branch
          %175 = sbr.rel (%p173) target = $region24
        $region23: #{tpu_custom_call.1} parent=11 // pred_region
          _
        $region24: #{tpu_custom_call.1} parent=11 // pred_fallthru
          _
      $region12: #{tpu_custom_call.1} parent=5 // pred_fallthru
        _
      %p176 = scmp.lt.s32.totalorder %s17, 2
      // Predicated region
      $region25: #{tpu_custom_call.1} parent=5 // pred_check
        %p177 = pneg %p176
      $region26: #{tpu_custom_call.1} parent=5 // pred_check_branch
        %179 = sbr.rel (%p177) target = $region28
      $region27: #{tpu_custom_call.1} parent=5 // pred_region
        // Predicated region
        $region29: #{tpu_custom_call.1} parent=27 // pred_check
          %p180 = pneg %p37
        $region30: #{tpu_custom_call.1} parent=27 // pred_check_branch
          %182 = sbr.rel (%p180) target = $region32
        $region31: #{tpu_custom_call.1} parent=27 // pred_region
          %s183 = sand.u32 %s27, 1
          %s184 = scalar_lea.sflag [#allocation3], %s183
          %s185 = sand.u32 %s27, 1
          %s186 = smul.addr %s185, 512
          %s187 = scalar_lea.vmem [#allocation2], %s186
          %s188 = smul.u32 32, %s17
          %s190 = ssub.s32 8192, 8192
          %191 = vsyncadd %s184, %s190
          %s192 = smul.addr %s188, 4
          %s193 = smul.addr %s192, 64
          %s194 = scalar_lea.hbm %s0, %s193
          %s195 = sshll.u32 %s187, 4
          %s196 = int_to_ptr.vmem [resolvable:$true] %s195
          %201 = dma.hbm_to_vmem [thread:$0]  %s194, 8192, %s196, %s184, 256, 256, 16
        $region32: #{tpu_custom_call.1} parent=27 // pred_fallthru
          _
      $region28: #{tpu_custom_call.1} parent=5 // pred_fallthru
        _
      %p202 = scmp.le.s32.totalorder 1, %s17
      %p203 = scmp.lt.s32.totalorder %s17, 3
      %p204 = pnand %p202, %p203
      %p205 = pneg %p204
      // Predicated region
      $region33: #{tpu_custom_call.1} parent=5 // pred_check
        _
      $region34: #{tpu_custom_call.1} parent=5 // pred_check_branch
        %207 = sbr.rel (%p204) target = $region36
      $region35: #{tpu_custom_call.1} parent=5 // pred_region
        %s208 = ssub.s32 %s17, 1
        %s209 = sand.u32 %s30, 1
        %s210 = scalar_lea.sflag [#allocation3], %s209
        %s211 = sand.u32 %s30, 1
        %s212 = smul.addr %s211, 512
        %s213 = scalar_lea.vmem [#allocation2], %s212
        // Predicated region
        $region37: #{tpu_custom_call.1} parent=35 // pred_check
          %p214 = pneg %p43
        $region38: #{tpu_custom_call.1} parent=35 // pred_check_branch
          %216 = sbr.rel (%p214) target = $region40
        $region39: #{tpu_custom_call.1} parent=35 // pred_region
          %217 = dma.done %s210, 8192
        $region40: #{tpu_custom_call.1} parent=35 // pred_fallthru
          _
        // Predicated region
        $region41: #{tpu_custom_call.1} parent=35 // pred_check
          %p218 = pneg %p64
        $region42: #{tpu_custom_call.1} parent=35 // pred_check_branch
          %220 = sbr.rel (%p218) target = $region44
        $region43: #{tpu_custom_call.1} parent=35 // pred_region
          %221 = dma.done [#allocation6], 4096
        $region44: #{tpu_custom_call.1} parent=35 // pred_fallthru
          _
        // Predicated region
        $region45: #{tpu_custom_call.1} parent=35 // pred_check
          %p222 = pneg %p85
        $region46: #{tpu_custom_call.1} parent=35 // pred_check_branch
          %224 = sbr.rel (%p222) target = $region48
        $region47: #{tpu_custom_call.1} parent=35 // pred_region
          %225 = dma.done [#allocation6], 1024
        $region48: #{tpu_custom_call.1} parent=35 // pred_fallthru
          _
        %s226 = sand.u32 %s30, 1
        %s227 = scalar_lea.sflag [#allocation3], %s226
        %s228 = sand.u32 %s30, 1
        %s229 = smul.addr %s228, 512
        %s230 = scalar_lea.vmem [#allocation2], %s229
        %p231 = pneg %p43
        %p232 = pneg %p40
        %p233 = pneg %p64
        %p234 = pneg %p61
        %p235 = pneg %p85
        %p236 = pneg %p82
        %p237 = pneg %p106
        %p238 = pneg %p103
        %p239 = pneg %p132
        %p240 = pneg %p129
        %s241 = sand.u32 %s119, 1
        %s242 = scalar_lea.sflag [#allocation4], %s241
        %s243 = sand.u32 %s119, 1
        %s244 = smul.addr %s243, 128
        %s245 = scalar_lea.vmem [#allocation8], %s244
        %s246 = smul.u32 32, %s22
        %s247 = smul.u32 32, %s22
        %v249 = vld [vmem:[#allocation5] sm:$0xf]
        %v250 = vld [vmem:[#allocation5 + $0x4] sm:$0xf]
        %v251 = vld [vmem:[#allocation5 + $0x8] sm:$0xf]
        %v252 = vld [vmem:[#allocation5 + $0xc] sm:$0xf]
        %v253 = vld [vmem:[#allocation5 + $0x10] sm:$0xf]
        %v254 = vld [vmem:[#allocation5 + $0x14] sm:$0xf]
        %v255 = vld [vmem:[#allocation5 + $0x18] sm:$0xf]
        %v256 = vld [vmem:[#allocation5 + $0x1c] sm:$0xf]
        %v257 = vld [vmem:[#allocation5 + $0x20] sm:$0xf]
        %v258 = vld [vmem:[#allocation5 + $0x24] sm:$0xf]
        %v259 = vld [vmem:[#allocation5 + $0x28] sm:$0xf]
        %v260 = vld [vmem:[#allocation5 + $0x2c] sm:$0xf]
        %v261 = vld [vmem:[#allocation5 + $0x30] sm:$0xf]
        %v262 = vld [vmem:[#allocation5 + $0x34] sm:$0xf]
        %v263 = vld [vmem:[#allocation5 + $0x38] sm:$0xf]
        %v264 = vld [vmem:[#allocation5 + $0x3c] sm:$0xf]
        %v265 = vld [vmem:[#allocation5 + $0x40] sm:$0xf]
        %v266 = vld [vmem:[#allocation5 + $0x44] sm:$0xf]
        %v267 = vld [vmem:[#allocation5 + $0x48] sm:$0xf]
        %v268 = vld [vmem:[#allocation5 + $0x4c] sm:$0xf]
        %v269 = vld [vmem:[#allocation5 + $0x50] sm:$0xf]
        %v270 = vld [vmem:[#allocation5 + $0x54] sm:$0xf]
        %v271 = vld [vmem:[#allocation5 + $0x58] sm:$0xf]
        %v272 = vld [vmem:[#allocation5 + $0x5c] sm:$0xf]
        %v273 = vld [vmem:[#allocation5 + $0x60] sm:$0xf]
        %v274 = vld [vmem:[#allocation5 + $0x64] sm:$0xf]
        %v275 = vld [vmem:[#allocation5 + $0x68] sm:$0xf]
        %v276 = vld [vmem:[#allocation5 + $0x6c] sm:$0xf]
        %v277 = vld [vmem:[#allocation5 + $0x70] sm:$0xf]
        %v278 = vld [vmem:[#allocation5 + $0x74] sm:$0xf]
        %v279 = vld [vmem:[#allocation5 + $0x78] sm:$0xf]
        %v280 = vld [vmem:[#allocation5 + $0x7c] sm:$0xf]
        %v281 = vld [vmem:[#allocation5 + $0x80] sm:$0xf]
        %v282 = vld [vmem:[#allocation5 + $0x84] sm:$0xf]
        %v283 = vld [vmem:[#allocation5 + $0x88] sm:$0xf]
        %v284 = vld [vmem:[#allocation5 + $0x8c] sm:$0xf]
        %v285 = vld [vmem:[#allocation5 + $0x90] sm:$0xf]
        %v286 = vld [vmem:[#allocation5 + $0x94] sm:$0xf]
        %v287 = vld [vmem:[#allocation5 + $0x98] sm:$0xf]
        %v288 = vld [vmem:[#allocation5 + $0x9c] sm:$0xf]
        %v289 = vld [vmem:[#allocation5 + $0xa0] sm:$0xf]
        %v290 = vld [vmem:[#allocation5 + $0xa4] sm:$0xf]
        %v291 = vld [vmem:[#allocation5 + $0xa8] sm:$0xf]
        %v292 = vld [vmem:[#allocation5 + $0xac] sm:$0xf]
        %v293 = vld [vmem:[#allocation5 + $0xb0] sm:$0xf]
        %v294 = vld [vmem:[#allocation5 + $0xb4] sm:$0xf]
        %v295 = vld [vmem:[#allocation5 + $0xb8] sm:$0xf]
        %v296 = vld [vmem:[#allocation5 + $0xbc] sm:$0xf]
        %v297 = vld [vmem:[#allocation5 + $0xc0] sm:$0xf]
        %v298 = vld [vmem:[#allocation5 + $0xc4] sm:$0xf]
        %v299 = vld [vmem:[#allocation5 + $0xc8] sm:$0xf]
        %v300 = vld [vmem:[#allocation5 + $0xcc] sm:$0xf]
        %v301 = vld [vmem:[#allocation5 + $0xd0] sm:$0xf]
        %v302 = vld [vmem:[#allocation5 + $0xd4] sm:$0xf]
        %v303 = vld [vmem:[#allocation5 + $0xd8] sm:$0xf]
        %v304 = vld [vmem:[#allocation5 + $0xdc] sm:$0xf]
        %v305 = vld [vmem:[#allocation5 + $0xe0] sm:$0xf]
        %v306 = vld [vmem:[#allocation5 + $0xe4] sm:$0xf]
        %v307 = vld [vmem:[#allocation5 + $0xe8] sm:$0xf]
        %v308 = vld [vmem:[#allocation5 + $0xec] sm:$0xf]
        %v309 = vld [vmem:[#allocation5 + $0xf0] sm:$0xf]
        %v310 = vld [vmem:[#allocation5 + $0xf4] sm:$0xf]
        %v311 = vld [vmem:[#allocation5 + $0xf8] sm:$0xf]
        %v312 = vld [vmem:[#allocation5 + $0xfc] sm:$0xf]
        %v313 = vld [vmem:[#allocation7] sm:$0xf]
        %v314 = vld [vmem:[#allocation7 + $0x4] sm:$0xf]
        %v315 = vld [vmem:[#allocation7 + $0x8] sm:$0xf]
        %v316 = vld [vmem:[#allocation7 + $0xc] sm:$0xf]
        %v317 = vld [vmem:[#allocation7 + $0x10] sm:$0xf]
        %v318 = vld [vmem:[#allocation7 + $0x14] sm:$0xf]
        %v319 = vld [vmem:[#allocation7 + $0x18] sm:$0xf]
        %v320 = vld [vmem:[#allocation7 + $0x1c] sm:$0xf]
        %v321 = vld [vmem:[#allocation7 + $0x20] sm:$0xf]
        %v322 = vld [vmem:[#allocation7 + $0x24] sm:$0xf]
        %v323 = vld [vmem:[#allocation7 + $0x28] sm:$0xf]
        %v324 = vld [vmem:[#allocation7 + $0x2c] sm:$0xf]
        %v325 = vld [vmem:[#allocation7 + $0x30] sm:$0xf]
        %v326 = vld [vmem:[#allocation7 + $0x34] sm:$0xf]
        %v327 = vld [vmem:[#allocation7 + $0x38] sm:$0xf]
        %v328 = vld [vmem:[#allocation7 + $0x3c] sm:$0xf]
        %v393 = vunpack.c.l.b16 %v249
        %v394 = vunpack.c.l.b16 %v250
        %v395 = vunpack.c.l.b16 %v251
        %v396 = vunpack.c.l.b16 %v252
        %v397 = vunpack.c.l.b16 %v253
        %v398 = vunpack.c.l.b16 %v254
        %v399 = vunpack.c.l.b16 %v255
        %v400 = vunpack.c.l.b16 %v256
        %v401 = vunpack.c.l.b16 %v257
        %v402 = vunpack.c.l.b16 %v258
        %v403 = vunpack.c.l.b16 %v259
        %v404 = vunpack.c.l.b16 %v260
        %v405 = vunpack.c.l.b16 %v261
        %v406 = vunpack.c.l.b16 %v262
        %v407 = vunpack.c.l.b16 %v263
        %v408 = vunpack.c.l.b16 %v264
        %v409 = vunpack.c.l.b16 %v265
        %v410 = vunpack.c.l.b16 %v266
        %v411 = vunpack.c.l.b16 %v267
        %v412 = vunpack.c.l.b16 %v268
        %v413 = vunpack.c.l.b16 %v269
        %v414 = vunpack.c.l.b16 %v270
        %v415 = vunpack.c.l.b16 %v271
        %v416 = vunpack.c.l.b16 %v272
        %v417 = vunpack.c.l.b16 %v273
        %v418 = vunpack.c.l.b16 %v274
        %v419 = vunpack.c.l.b16 %v275
        %v420 = vunpack.c.l.b16 %v276
        %v421 = vunpack.c.l.b16 %v277
        %v422 = vunpack.c.l.b16 %v278
        %v423 = vunpack.c.l.b16 %v279
        %v424 = vunpack.c.l.b16 %v280
        %v425 = vunpack.c.l.b16 %v281
        %v426 = vunpack.c.l.b16 %v282
        %v427 = vunpack.c.l.b16 %v283
        %v428 = vunpack.c.l.b16 %v284
        %v429 = vunpack.c.l.b16 %v285
        %v430 = vunpack.c.l.b16 %v286
        %v431 = vunpack.c.l.b16 %v287
        %v432 = vunpack.c.l.b16 %v288
        %v433 = vunpack.c.l.b16 %v289
        %v434 = vunpack.c.l.b16 %v290
        %v435 = vunpack.c.l.b16 %v291
        %v436 = vunpack.c.l.b16 %v292
        %v437 = vunpack.c.l.b16 %v293
        %v438 = vunpack.c.l.b16 %v294
        %v439 = vunpack.c.l.b16 %v295
        %v440 = vunpack.c.l.b16 %v296
        %v441 = vunpack.c.l.b16 %v297
        %v442 = vunpack.c.l.b16 %v298
        %v443 = vunpack.c.l.b16 %v299
        %v444 = vunpack.c.l.b16 %v300
        %v445 = vunpack.c.l.b16 %v301
        %v446 = vunpack.c.l.b16 %v302
        %v447 = vunpack.c.l.b16 %v303
        %v448 = vunpack.c.l.b16 %v304
        %v449 = vunpack.c.l.b16 %v305
        %v450 = vunpack.c.l.b16 %v306
        %v451 = vunpack.c.l.b16 %v307
        %v452 = vunpack.c.l.b16 %v308
        %v453 = vunpack.c.l.b16 %v309
        %v454 = vunpack.c.l.b16 %v310
        %v455 = vunpack.c.l.b16 %v311
        %v456 = vunpack.c.l.b16 %v312
        %v457 = vpack.c.b16 %v394, %v393
        %v458 = vpack.c.b16 %v396, %v395
        %v459 = vpack.c.b16 %v398, %v397
        %v460 = vpack.c.b16 %v400, %v399
        %v461 = vpack.c.b16 %v402, %v401
        %v462 = vpack.c.b16 %v404, %v403
        %v463 = vpack.c.b16 %v406, %v405
        %v464 = vpack.c.b16 %v408, %v407
        %v465 = vpack.c.b16 %v410, %v409
        %v466 = vpack.c.b16 %v412, %v411
        %v467 = vpack.c.b16 %v414, %v413
        %v468 = vpack.c.b16 %v416, %v415
        %v469 = vpack.c.b16 %v418, %v417
        %v470 = vpack.c.b16 %v420, %v419
        %v471 = vpack.c.b16 %v422, %v421
        %v472 = vpack.c.b16 %v424, %v423
        %v473 = vpack.c.b16 %v426, %v425
        %v474 = vpack.c.b16 %v428, %v427
        %v475 = vpack.c.b16 %v430, %v429
        %v476 = vpack.c.b16 %v432, %v431
        %v477 = vpack.c.b16 %v434, %v433
        %v478 = vpack.c.b16 %v436, %v435
        %v479 = vpack.c.b16 %v438, %v437
        %v480 = vpack.c.b16 %v440, %v439
        %v481 = vpack.c.b16 %v442, %v441
        %v482 = vpack.c.b16 %v444, %v443
        %v483 = vpack.c.b16 %v446, %v445
        %v484 = vpack.c.b16 %v448, %v447
        %v485 = vpack.c.b16 %v450, %v449
        %v486 = vpack.c.b16 %v452, %v451
        %v487 = vpack.c.b16 %v454, %v453
        %v488 = vpack.c.b16 %v456, %v455
        %v537 = vunpack.c.l.b16 %v313
        %v538 = vunpack.c.l.b16 %v314
        %v539 = vunpack.c.l.b16 %v315
        %v540 = vunpack.c.l.b16 %v316
        %v541 = vunpack.c.l.b16 %v317
        %v542 = vunpack.c.l.b16 %v318
        %v543 = vunpack.c.l.b16 %v319
        %v544 = vunpack.c.l.b16 %v320
        %v545 = vunpack.c.l.b16 %v321
        %v546 = vunpack.c.l.b16 %v322
        %v547 = vunpack.c.l.b16 %v323
        %v548 = vunpack.c.l.b16 %v324
        %v549 = vunpack.c.l.b16 %v325
        %v550 = vunpack.c.l.b16 %v326
        %v551 = vunpack.c.l.b16 %v327
        %v552 = vunpack.c.l.b16 %v328
        %v553 = vpack.c.b16 %v538, %v537
        %v554 = vpack.c.b16 %v540, %v539
        %v555 = vpack.c.b16 %v542, %v541
        %v556 = vpack.c.b16 %v544, %v543
        %v557 = vpack.c.b16 %v546, %v545
        %v558 = vpack.c.b16 %v548, %v547
        %v559 = vpack.c.b16 %v550, %v549
        %v560 = vpack.c.b16 %v552, %v551
        %569 = vmatprep.subr.bf16.mxu0 0
        %570 = vmatpush1.bf16.msra.mxu0 %v560
        %571 = vmatprep.subr.bf16.mxu0 0
        %572 = vmatpush1.bf16.msra.mxu0 %v559
        %573 = vmatprep.subr.bf16.mxu0 0
        %574 = vmatpush1.bf16.msra.mxu0 %v558
        %575 = vmatprep.subr.bf16.mxu0 0
        %576 = vmatpush1.bf16.msra.mxu0 %v557
        %577 = vmatprep.subr.bf16.mxu0 0
        %578 = vmatpush1.bf16.msra.mxu0 %v556
        %579 = vmatprep.subr.bf16.mxu0 0
        %580 = vmatpush1.bf16.msra.mxu0 %v555
        %581 = vmatprep.subr.bf16.mxu0 0
        %582 = vmatpush1.bf16.msra.mxu0 %v554
        %583 = vmatprep.subr.bf16.mxu0 0
        %584 = vmatpush1.bf16.msra.mxu0 %v553
        %585 = vmatprep.subr.bf16.mxu0 0
        %586 = vmatpush2.bf16.msra.mxu0 0
        %587 = vmatprep.subr.bf16.mxu0 0
        %588 = vmatpush2.bf16.msra.mxu0 0
        %589 = vmatprep.subr.bf16.mxu0 0
        %590 = vmatpush2.bf16.msra.mxu0 0
        %591 = vmatprep.subr.bf16.mxu0 0
        %592 = vmatpush2.bf16.msra.mxu0 0
        %593 = vmatprep.subr.bf16.mxu0 0
        %594 = vmatpush2.bf16.msra.mxu0 0
        %595 = vmatprep.subr.bf16.mxu0 0
        %596 = vmatpush2.bf16.msra.mxu0 0
        %597 = vmatprep.subr.bf16.mxu0 0
        %598 = vmatpush2.bf16.msra.mxu0 0
        %599 = vmatprep.subr.bf16.mxu0 0
        %600 = vmatpush2.bf16.msra.mxu0 0
        %601 = vmatprep.mubr.bf16.mxu0 0
        %602 = vmatmul.mubr.bf16.gmra.mxu0 %v457
        %v603 = vpop.f32.mrf.mxu0
        %v604 = vadd.f32 0.0, %v603
        %v605 = vpop.f32.mrf.mxu0
        %v606 = vpop.f32.mrf.mxu0
        %v607 = vadd.f32 0.0, %v606
        %v608 = vpop.f32.mrf.mxu0
        %609 = vmatprep.mubr.bf16.mxu0 0
        %610 = vmatmul.mubr.bf16.gmra.mxu0 %v458
        %v611 = vpop.f32.mrf.mxu0
        %v612 = vadd.f32 0.0, %v611
        %v613 = vpop.f32.mrf.mxu0
        %v614 = vpop.f32.mrf.mxu0
        %v615 = vadd.f32 0.0, %v614
        %v616 = vpop.f32.mrf.mxu0
        %617 = vmatprep.mubr.bf16.mxu0 0
        %618 = vmatmul.mubr.bf16.gmra.mxu0 %v459
        %v619 = vpop.f32.mrf.mxu0
        %v620 = vadd.f32 0.0, %v619
        %v621 = vpop.f32.mrf.mxu0
        %v622 = vpop.f32.mrf.mxu0
        %v623 = vadd.f32 0.0, %v622
        %v624 = vpop.f32.mrf.mxu0
        %625 = vmatprep.mubr.bf16.mxu0 0
        %626 = vmatmul.mubr.bf16.gmra.mxu0 %v460
        %v627 = vpop.f32.mrf.mxu0
        %v628 = vadd.f32 0.0, %v627
        %v629 = vpop.f32.mrf.mxu0
        %v630 = vpop.f32.mrf.mxu0
        %v631 = vadd.f32 0.0, %v630
        %v632 = vpop.f32.mrf.mxu0
        %633 = vmatprep.mubr.bf16.mxu0 0
        %634 = vmatmul.mubr.bf16.gmra.mxu0 %v461
        %v635 = vpop.f32.mrf.mxu0
        %v636 = vadd.f32 0.0, %v635
        %v637 = vpop.f32.mrf.mxu0
        %v638 = vpop.f32.mrf.mxu0
        %v639 = vadd.f32 0.0, %v638
        %v640 = vpop.f32.mrf.mxu0
        %641 = vmatprep.mubr.bf16.mxu0 0
        %642 = vmatmul.mubr.bf16.gmra.mxu0 %v462
        %v643 = vpop.f32.mrf.mxu0
        %v644 = vadd.f32 0.0, %v643
        %v645 = vpop.f32.mrf.mxu0
        %v646 = vpop.f32.mrf.mxu0
        %v647 = vadd.f32 0.0, %v646
        %v648 = vpop.f32.mrf.mxu0
        %649 = vmatprep.mubr.bf16.mxu0 0
        %650 = vmatmul.mubr.bf16.gmra.mxu0 %v463
        %v651 = vpop.f32.mrf.mxu0
        %v652 = vadd.f32 0.0, %v651
        %v653 = vpop.f32.mrf.mxu0
        %v654 = vpop.f32.mrf.mxu0
        %v655 = vadd.f32 0.0, %v654
        %v656 = vpop.f32.mrf.mxu0
        %657 = vmatprep.mubr.bf16.mxu0 0
        %658 = vmatmul.mubr.bf16.gmra.mxu0 %v464
        %v659 = vpop.f32.mrf.mxu0
        %v660 = vadd.f32 0.0, %v659
        %v661 = vpop.f32.mrf.mxu0
        %v662 = vpop.f32.mrf.mxu0
        %v663 = vadd.f32 0.0, %v662
        %v664 = vpop.f32.mrf.mxu0
        %665 = vmatprep.mubr.bf16.mxu0 0
        %666 = vmatmul.mubr.bf16.gmra.mxu0 %v465
        %v667 = vpop.f32.mrf.mxu0
        %v668 = vadd.f32 0.0, %v667
        %v669 = vpop.f32.mrf.mxu0
        %v670 = vpop.f32.mrf.mxu0
        %v671 = vadd.f32 0.0, %v670
        %v672 = vpop.f32.mrf.mxu0
        %673 = vmatprep.mubr.bf16.mxu0 0
        %674 = vmatmul.mubr.bf16.gmra.mxu0 %v466
        %v675 = vpop.f32.mrf.mxu0
        %v676 = vadd.f32 0.0, %v675
        %v677 = vpop.f32.mrf.mxu0
        %v678 = vpop.f32.mrf.mxu0
        %v679 = vadd.f32 0.0, %v678
        %v680 = vpop.f32.mrf.mxu0
        %681 = vmatprep.mubr.bf16.mxu0 0
        %682 = vmatmul.mubr.bf16.gmra.mxu0 %v467
        %v683 = vpop.f32.mrf.mxu0
        %v684 = vadd.f32 0.0, %v683
        %v685 = vpop.f32.mrf.mxu0
        %v686 = vpop.f32.mrf.mxu0
        %v687 = vadd.f32 0.0, %v686
        %v688 = vpop.f32.mrf.mxu0
        %689 = vmatprep.mubr.bf16.mxu0 0
        %690 = vmatmul.mubr.bf16.gmra.mxu0 %v468
        %v691 = vpop.f32.mrf.mxu0
        %v692 = vadd.f32 0.0, %v691
        %v693 = vpop.f32.mrf.mxu0
        %v694 = vpop.f32.mrf.mxu0
        %v695 = vadd.f32 0.0, %v694
        %v696 = vpop.f32.mrf.mxu0
        %697 = vmatprep.mubr.bf16.mxu0 0
        %698 = vmatmul.mubr.bf16.gmra.mxu0 %v469
        %v699 = vpop.f32.mrf.mxu0
        %v700 = vadd.f32 0.0, %v699
        %v701 = vpop.f32.mrf.mxu0
        %v702 = vpop.f32.mrf.mxu0
        %v703 = vadd.f32 0.0, %v702
        %v704 = vpop.f32.mrf.mxu0
        %705 = vmatprep.mubr.bf16.mxu0 0
        %706 = vmatmul.mubr.bf16.gmra.mxu0 %v470
        %v707 = vpop.f32.mrf.mxu0
        %v708 = vadd.f32 0.0, %v707
        %v709 = vpop.f32.mrf.mxu0
        %v710 = vpop.f32.mrf.mxu0
        %v711 = vadd.f32 0.0, %v710
        %v712 = vpop.f32.mrf.mxu0
        %713 = vmatprep.mubr.bf16.mxu0 0
        %714 = vmatmul.mubr.bf16.gmra.mxu0 %v471
        %v715 = vpop.f32.mrf.mxu0
        %v716 = vadd.f32 0.0, %v715
        %v717 = vpop.f32.mrf.mxu0
        %v718 = vpop.f32.mrf.mxu0
        %v719 = vadd.f32 0.0, %v718
        %v720 = vpop.f32.mrf.mxu0
        %721 = vmatprep.mubr.bf16.mxu0 0
        %722 = vmatmul.mubr.bf16.gmra.mxu0 %v472
        %v723 = vpop.f32.mrf.mxu0
        %v724 = vadd.f32 0.0, %v723
        %v725 = vpop.f32.mrf.mxu0
        %v726 = vpop.f32.mrf.mxu0
        %v727 = vadd.f32 0.0, %v726
        %v728 = vpop.f32.mrf.mxu0
        %729 = vmatprep.mubr.bf16.mxu0 0
        %730 = vmatmul.mubr.bf16.gmra.mxu0 %v473
        %v731 = vpop.f32.mrf.mxu0
        %v732 = vadd.f32 0.0, %v731
        %v733 = vpop.f32.mrf.mxu0
        %v734 = vpop.f32.mrf.mxu0
        %v735 = vadd.f32 0.0, %v734
        %v736 = vpop.f32.mrf.mxu0
        %737 = vmatprep.mubr.bf16.mxu0 0
        %738 = vmatmul.mubr.bf16.gmra.mxu0 %v474
        %v739 = vpop.f32.mrf.mxu0
        %v740 = vadd.f32 0.0, %v739
        %v741 = vpop.f32.mrf.mxu0
        %v742 = vpop.f32.mrf.mxu0
        %v743 = vadd.f32 0.0, %v742
        %v744 = vpop.f32.mrf.mxu0
        %745 = vmatprep.mubr.bf16.mxu0 0
        %746 = vmatmul.mubr.bf16.gmra.mxu0 %v475
        %v747 = vpop.f32.mrf.mxu0
        %v748 = vadd.f32 0.0, %v747
        %v749 = vpop.f32.mrf.mxu0
        %v750 = vpop.f32.mrf.mxu0
        %v751 = vadd.f32 0.0, %v750
        %v752 = vpop.f32.mrf.mxu0
        %753 = vmatprep.mubr.bf16.mxu0 0
        %754 = vmatmul.mubr.bf16.gmra.mxu0 %v476
        %v755 = vpop.f32.mrf.mxu0
        %v756 = vadd.f32 0.0, %v755
        %v757 = vpop.f32.mrf.mxu0
        %v758 = vpop.f32.mrf.mxu0
        %v759 = vadd.f32 0.0, %v758
        %v760 = vpop.f32.mrf.mxu0
        %761 = vmatprep.mubr.bf16.mxu0 0
        %762 = vmatmul.mubr.bf16.gmra.mxu0 %v477
        %v763 = vpop.f32.mrf.mxu0
        %v764 = vadd.f32 0.0, %v763
        %v765 = vpop.f32.mrf.mxu0
        %v766 = vpop.f32.mrf.mxu0
        %v767 = vadd.f32 0.0, %v766
        %v768 = vpop.f32.mrf.mxu0
        %769 = vmatprep.mubr.bf16.mxu0 0
        %770 = vmatmul.mubr.bf16.gmra.mxu0 %v478
        %v771 = vpop.f32.mrf.mxu0
        %v772 = vadd.f32 0.0, %v771
        %v773 = vpop.f32.mrf.mxu0
        %v774 = vpop.f32.mrf.mxu0
        %v775 = vadd.f32 0.0, %v774
        %v776 = vpop.f32.mrf.mxu0
        %777 = vmatprep.mubr.bf16.mxu0 0
        %778 = vmatmul.mubr.bf16.gmra.mxu0 %v479
        %v779 = vpop.f32.mrf.mxu0
        %v780 = vadd.f32 0.0, %v779
        %v781 = vpop.f32.mrf.mxu0
        %v782 = vpop.f32.mrf.mxu0
        %v783 = vadd.f32 0.0, %v782
        %v784 = vpop.f32.mrf.mxu0
        %785 = vmatprep.mubr.bf16.mxu0 0
        %786 = vmatmul.mubr.bf16.gmra.mxu0 %v480
        %v787 = vpop.f32.mrf.mxu0
        %v788 = vadd.f32 0.0, %v787
        %v789 = vpop.f32.mrf.mxu0
        %v790 = vpop.f32.mrf.mxu0
        %v791 = vadd.f32 0.0, %v790
        %v792 = vpop.f32.mrf.mxu0
        %793 = vmatprep.mubr.bf16.mxu0 0
        %794 = vmatmul.mubr.bf16.gmra.mxu0 %v481
        %v795 = vpop.f32.mrf.mxu0
        %v796 = vadd.f32 0.0, %v795
        %v797 = vpop.f32.mrf.mxu0
        %v798 = vpop.f32.mrf.mxu0
        %v799 = vadd.f32 0.0, %v798
        %v800 = vpop.f32.mrf.mxu0
        %801 = vmatprep.mubr.bf16.mxu0 0
        %802 = vmatmul.mubr.bf16.gmra.mxu0 %v482
        %v803 = vpop.f32.mrf.mxu0
        %v804 = vadd.f32 0.0, %v803
        %v805 = vpop.f32.mrf.mxu0
        %v806 = vpop.f32.mrf.mxu0
        %v807 = vadd.f32 0.0, %v806
        %v808 = vpop.f32.mrf.mxu0
        %809 = vmatprep.mubr.bf16.mxu0 0
        %810 = vmatmul.mubr.bf16.gmra.mxu0 %v483
        %v811 = vpop.f32.mrf.mxu0
        %v812 = vadd.f32 0.0, %v811
        %v813 = vpop.f32.mrf.mxu0
        %v814 = vpop.f32.mrf.mxu0
        %v815 = vadd.f32 0.0, %v814
        %v816 = vpop.f32.mrf.mxu0
        %817 = vmatprep.mubr.bf16.mxu0 0
        %818 = vmatmul.mubr.bf16.gmra.mxu0 %v484
        %v819 = vpop.f32.mrf.mxu0
        %v820 = vadd.f32 0.0, %v819
        %v821 = vpop.f32.mrf.mxu0
        %v822 = vpop.f32.mrf.mxu0
        %v823 = vadd.f32 0.0, %v822
        %v824 = vpop.f32.mrf.mxu0
        %825 = vmatprep.mubr.bf16.mxu0 0
        %826 = vmatmul.mubr.bf16.gmra.mxu0 %v485
        %v827 = vpop.f32.mrf.mxu0
        %v828 = vadd.f32 0.0, %v827
        %v829 = vpop.f32.mrf.mxu0
        %v830 = vpop.f32.mrf.mxu0
        %v831 = vadd.f32 0.0, %v830
        %v832 = vpop.f32.mrf.mxu0
        %833 = vmatprep.mubr.bf16.mxu0 0
        %834 = vmatmul.mubr.bf16.gmra.mxu0 %v486
        %v835 = vpop.f32.mrf.mxu0
        %v836 = vadd.f32 0.0, %v835
        %v837 = vpop.f32.mrf.mxu0
        %v838 = vpop.f32.mrf.mxu0
        %v839 = vadd.f32 0.0, %v838
        %v840 = vpop.f32.mrf.mxu0
        %841 = vmatprep.mubr.bf16.mxu0 0
        %842 = vmatmul.mubr.bf16.gmra.mxu0 %v487
        %v843 = vpop.f32.mrf.mxu0
        %v844 = vadd.f32 0.0, %v843
        %v845 = vpop.f32.mrf.mxu0
        %v846 = vpop.f32.mrf.mxu0
        %v847 = vadd.f32 0.0, %v846
        %v848 = vpop.f32.mrf.mxu0
        %849 = vmatprep.mubr.bf16.mxu0 0
        %850 = vmatmul.mubr.bf16.gmra.mxu0 %v488
        %v851 = vpop.f32.mrf.mxu0
        %v852 = vadd.f32 0.0, %v851
        %v853 = vpop.f32.mrf.mxu0
        %v854 = vpop.f32.mrf.mxu0
        %v855 = vadd.f32 0.0, %v854
        %v856 = vpop.f32.mrf.mxu0
        %857 = vdwg.mxu0
        %v858 = vpack.c.bf16 %v607, %v604
        %v859 = vpack.c.bf16 %v615, %v612
        %v860 = vpack.c.bf16 %v623, %v620
        %v861 = vpack.c.bf16 %v631, %v628
        %v862 = vpack.c.bf16 %v639, %v636
        %v863 = vpack.c.bf16 %v647, %v644
        %v864 = vpack.c.bf16 %v655, %v652
        %v865 = vpack.c.bf16 %v663, %v660
        %v866 = vpack.c.bf16 %v671, %v668
        %v867 = vpack.c.bf16 %v679, %v676
        %v868 = vpack.c.bf16 %v687, %v684
        %v869 = vpack.c.bf16 %v695, %v692
        %v870 = vpack.c.bf16 %v703, %v700
        %v871 = vpack.c.bf16 %v711, %v708
        %v872 = vpack.c.bf16 %v719, %v716
        %v873 = vpack.c.bf16 %v727, %v724
        %v874 = vpack.c.bf16 %v735, %v732
        %v875 = vpack.c.bf16 %v743, %v740
        %v876 = vpack.c.bf16 %v751, %v748
        %v877 = vpack.c.bf16 %v759, %v756
        %v878 = vpack.c.bf16 %v767, %v764
        %v879 = vpack.c.bf16 %v775, %v772
        %v880 = vpack.c.bf16 %v783, %v780
        %v881 = vpack.c.bf16 %v791, %v788
        %v882 = vpack.c.bf16 %v799, %v796
        %v883 = vpack.c.bf16 %v807, %v804
        %v884 = vpack.c.bf16 %v815, %v812
        %v885 = vpack.c.bf16 %v823, %v820
        %v886 = vpack.c.bf16 %v831, %v828
        %v887 = vpack.c.bf16 %v839, %v836
        %v888 = vpack.c.bf16 %v847, %v844
        %v889 = vpack.c.bf16 %v855, %v852
        %v890 = vld [vmem:[%s213] sm:$0xff]
        %v891 = vld [vmem:[%s213 + $0x8] sm:$0xff]
        %v892 = vld [vmem:[%s213 + $0x10] sm:$0xff]
        %v893 = vld [vmem:[%s213 + $0x18] sm:$0xff]
        %v894 = vld [vmem:[%s213 + $0x20] sm:$0xff]
        %v895 = vld [vmem:[%s213 + $0x28] sm:$0xff]
        %v896 = vld [vmem:[%s213 + $0x30] sm:$0xff]
        %v897 = vld [vmem:[%s213 + $0x38] sm:$0xff]
        %v898 = vld [vmem:[%s213 + $0x40] sm:$0xff]
        %v899 = vld [vmem:[%s213 + $0x48] sm:$0xff]
        %v900 = vld [vmem:[%s213 + $0x50] sm:$0xff]
        %v901 = vld [vmem:[%s213 + $0x58] sm:$0xff]
        %v902 = vld [vmem:[%s213 + $0x60] sm:$0xff]
        %v903 = vld [vmem:[%s213 + $0x68] sm:$0xff]
        %v904 = vld [vmem:[%s213 + $0x70] sm:$0xff]
        %v905 = vld [vmem:[%s213 + $0x78] sm:$0xff]
        %v906 = vld [vmem:[%s213 + $0x80] sm:$0xff]
        %v907 = vld [vmem:[%s213 + $0x88] sm:$0xff]
        %v908 = vld [vmem:[%s213 + $0x90] sm:$0xff]
        %v909 = vld [vmem:[%s213 + $0x98] sm:$0xff]
        %v910 = vld [vmem:[%s213 + $0xa0] sm:$0xff]
        %v911 = vld [vmem:[%s213 + $0xa8] sm:$0xff]
        %v912 = vld [vmem:[%s213 + $0xb0] sm:$0xff]
        %v913 = vld [vmem:[%s213 + $0xb8] sm:$0xff]
        %v914 = vld [vmem:[%s213 + $0xc0] sm:$0xff]
        %v915 = vld [vmem:[%s213 + $0xc8] sm:$0xff]
        %v916 = vld [vmem:[%s213 + $0xd0] sm:$0xff]
        %v917 = vld [vmem:[%s213 + $0xd8] sm:$0xff]
        %v918 = vld [vmem:[%s213 + $0xe0] sm:$0xff]
        %v919 = vld [vmem:[%s213 + $0xe8] sm:$0xff]
        %v920 = vld [vmem:[%s213 + $0xf0] sm:$0xff]
        %v921 = vld [vmem:[%s213 + $0xf8] sm:$0xff]
        %v922 = vld [vmem:[%s213 + $0x100] sm:$0xff]
        %v923 = vld [vmem:[%s213 + $0x108] sm:$0xff]
        %v924 = vld [vmem:[%s213 + $0x110] sm:$0xff]
        %v925 = vld [vmem:[%s213 + $0x118] sm:$0xff]
        %v926 = vld [vmem:[%s213 + $0x120] sm:$0xff]
        %v927 = vld [vmem:[%s213 + $0x128] sm:$0xff]
        %v928 = vld [vmem:[%s213 + $0x130] sm:$0xff]
        %v929 = vld [vmem:[%s213 + $0x138] sm:$0xff]
        %v930 = vld [vmem:[%s213 + $0x140] sm:$0xff]
        %v931 = vld [vmem:[%s213 + $0x148] sm:$0xff]
        %v932 = vld [vmem:[%s213 + $0x150] sm:$0xff]
        %v933 = vld [vmem:[%s213 + $0x158] sm:$0xff]
        %v934 = vld [vmem:[%s213 + $0x160] sm:$0xff]
        %v935 = vld [vmem:[%s213 + $0x168] sm:$0xff]
        %v936 = vld [vmem:[%s213 + $0x170] sm:$0xff]
        %v937 = vld [vmem:[%s213 + $0x178] sm:$0xff]
        %v938 = vld [vmem:[%s213 + $0x180] sm:$0xff]
        %v939 = vld [vmem:[%s213 + $0x188] sm:$0xff]
        %v940 = vld [vmem:[%s213 + $0x190] sm:$0xff]
        %v941 = vld [vmem:[%s213 + $0x198] sm:$0xff]
        %v942 = vld [vmem:[%s213 + $0x1a0] sm:$0xff]
        %v943 = vld [vmem:[%s213 + $0x1a8] sm:$0xff]
        %v944 = vld [vmem:[%s213 + $0x1b0] sm:$0xff]
        %v945 = vld [vmem:[%s213 + $0x1b8] sm:$0xff]
        %v946 = vld [vmem:[%s213 + $0x1c0] sm:$0xff]
        %v947 = vld [vmem:[%s213 + $0x1c8] sm:$0xff]
        %v948 = vld [vmem:[%s213 + $0x1d0] sm:$0xff]
        %v949 = vld [vmem:[%s213 + $0x1d8] sm:$0xff]
        %v950 = vld [vmem:[%s213 + $0x1e0] sm:$0xff]
        %v951 = vld [vmem:[%s213 + $0x1e8] sm:$0xff]
        %v952 = vld [vmem:[%s213 + $0x1f0] sm:$0xff]
        %v953 = vld [vmem:[%s213 + $0x1f8] sm:$0xff]
        %v954 = vld [vmem:[%s3] sm:$0x1]
        %v956 = vlaneseq
        %v957 = vshrl.u32 %v956, 7
        %v958 = vsub.s32 0, %v957
        %v959 = vrot.slane %v954, %v958
        %v1025 = vunpack.c.l.b16 %v890
        %v1026 = vunpack.c.h.b16 %v890
        %v1027 = vunpack.c.l.b16 %v891
        %v1028 = vunpack.c.h.b16 %v891
        %v1029 = vunpack.c.l.b16 %v892
        %v1030 = vunpack.c.h.b16 %v892
        %v1031 = vunpack.c.l.b16 %v893
        %v1032 = vunpack.c.h.b16 %v893
        %v1033 = vunpack.c.l.b16 %v894
        %v1034 = vunpack.c.h.b16 %v894
        %v1035 = vunpack.c.l.b16 %v895
        %v1036 = vunpack.c.h.b16 %v895
        %v1037 = vunpack.c.l.b16 %v896
        %v1038 = vunpack.c.h.b16 %v896
        %v1039 = vunpack.c.l.b16 %v897
        %v1040 = vunpack.c.h.b16 %v897
        %v1041 = vunpack.c.l.b16 %v898
        %v1042 = vunpack.c.h.b16 %v898
        %v1043 = vunpack.c.l.b16 %v899
        %v1044 = vunpack.c.h.b16 %v899
        %v1045 = vunpack.c.l.b16 %v900
        %v1046 = vunpack.c.h.b16 %v900
        %v1047 = vunpack.c.l.b16 %v901
        %v1048 = vunpack.c.h.b16 %v901
        %v1049 = vunpack.c.l.b16 %v902
        %v1050 = vunpack.c.h.b16 %v902
        %v1051 = vunpack.c.l.b16 %v903
        %v1052 = vunpack.c.h.b16 %v903
        %v1053 = vunpack.c.l.b16 %v904
        %v1054 = vunpack.c.h.b16 %v904
        %v1055 = vunpack.c.l.b16 %v905
        %v1056 = vunpack.c.h.b16 %v905
        %v1057 = vunpack.c.l.b16 %v906
        %v1058 = vunpack.c.h.b16 %v906
        %v1059 = vunpack.c.l.b16 %v907
        %v1060 = vunpack.c.h.b16 %v907
        %v1061 = vunpack.c.l.b16 %v908
        %v1062 = vunpack.c.h.b16 %v908
        %v1063 = vunpack.c.l.b16 %v909
        %v1064 = vunpack.c.h.b16 %v909
        %v1065 = vunpack.c.l.b16 %v910
        %v1066 = vunpack.c.h.b16 %v910
        %v1067 = vunpack.c.l.b16 %v911
        %v1068 = vunpack.c.h.b16 %v911
        %v1069 = vunpack.c.l.b16 %v912
        %v1070 = vunpack.c.h.b16 %v912
        %v1071 = vunpack.c.l.b16 %v913
        %v1072 = vunpack.c.h.b16 %v913
        %v1073 = vunpack.c.l.b16 %v914
        %v1074 = vunpack.c.h.b16 %v914
        %v1075 = vunpack.c.l.b16 %v915
        %v1076 = vunpack.c.h.b16 %v915
        %v1077 = vunpack.c.l.b16 %v916
        %v1078 = vunpack.c.h.b16 %v916
        %v1079 = vunpack.c.l.b16 %v917
        %v1080 = vunpack.c.h.b16 %v917
        %v1081 = vunpack.c.l.b16 %v918
        %v1082 = vunpack.c.h.b16 %v918
        %v1083 = vunpack.c.l.b16 %v919
        %v1084 = vunpack.c.h.b16 %v919
        %v1085 = vunpack.c.l.b16 %v920
        %v1086 = vunpack.c.h.b16 %v920
        %v1087 = vunpack.c.l.b16 %v921
        %v1088 = vunpack.c.h.b16 %v921
        %v1089 = vunpack.c.l.b16 %v922
        %v1090 = vunpack.c.h.b16 %v922
        %v1091 = vunpack.c.l.b16 %v923
        %v1092 = vunpack.c.h.b16 %v923
        %v1093 = vunpack.c.l.b16 %v924
        %v1094 = vunpack.c.h.b16 %v924
        %v1095 = vunpack.c.l.b16 %v925
        %v1096 = vunpack.c.h.b16 %v925
        %v1097 = vunpack.c.l.b16 %v926
        %v1098 = vunpack.c.h.b16 %v926
        %v1099 = vunpack.c.l.b16 %v927
        %v1100 = vunpack.c.h.b16 %v927
        %v1101 = vunpack.c.l.b16 %v928
        %v1102 = vunpack.c.h.b16 %v928
        %v1103 = vunpack.c.l.b16 %v929
        %v1104 = vunpack.c.h.b16 %v929
        %v1105 = vunpack.c.l.b16 %v930
        %v1106 = vunpack.c.h.b16 %v930
        %v1107 = vunpack.c.l.b16 %v931
        %v1108 = vunpack.c.h.b16 %v931
        %v1109 = vunpack.c.l.b16 %v932
        %v1110 = vunpack.c.h.b16 %v932
        %v1111 = vunpack.c.l.b16 %v933
        %v1112 = vunpack.c.h.b16 %v933
        %v1113 = vunpack.c.l.b16 %v934
        %v1114 = vunpack.c.h.b16 %v934
        %v1115 = vunpack.c.l.b16 %v935
        %v1116 = vunpack.c.h.b16 %v935
        %v1117 = vunpack.c.l.b16 %v936
        %v1118 = vunpack.c.h.b16 %v936
        %v1119 = vunpack.c.l.b16 %v937
        %v1120 = vunpack.c.h.b16 %v937
        %v1121 = vunpack.c.l.b16 %v938
        %v1122 = vunpack.c.h.b16 %v938
        %v1123 = vunpack.c.l.b16 %v939
        %v1124 = vunpack.c.h.b16 %v939
        %v1125 = vunpack.c.l.b16 %v940
        %v1126 = vunpack.c.h.b16 %v940
        %v1127 = vunpack.c.l.b16 %v941
        %v1128 = vunpack.c.h.b16 %v941
        %v1129 = vunpack.c.l.b16 %v942
        %v1130 = vunpack.c.h.b16 %v942
        %v1131 = vunpack.c.l.b16 %v943
        %v1132 = vunpack.c.h.b16 %v943
        %v1133 = vunpack.c.l.b16 %v944
        %v1134 = vunpack.c.h.b16 %v944
        %v1135 = vunpack.c.l.b16 %v945
        %v1136 = vunpack.c.h.b16 %v945
        %v1137 = vunpack.c.l.b16 %v946
        %v1138 = vunpack.c.h.b16 %v946
        %v1139 = vunpack.c.l.b16 %v947
        %v1140 = vunpack.c.h.b16 %v947
        %v1141 = vunpack.c.l.b16 %v948
        %v1142 = vunpack.c.h.b16 %v948
        %v1143 = vunpack.c.l.b16 %v949
        %v1144 = vunpack.c.h.b16 %v949
        %v1145 = vunpack.c.l.b16 %v950
        %v1146 = vunpack.c.h.b16 %v950
        %v1147 = vunpack.c.l.b16 %v951
        %v1148 = vunpack.c.h.b16 %v951
        %v1149 = vunpack.c.l.b16 %v952
        %v1150 = vunpack.c.h.b16 %v952
        %v1151 = vunpack.c.l.b16 %v953
        %v1152 = vunpack.c.h.b16 %v953
        %v1153 = vpack.c.b16 %v1029, %v1025
        %v1154 = vpack.c.b16 %v1030, %v1026
        %v1155 = vpack.c.b16 %v1031, %v1027
        %v1156 = vpack.c.b16 %v1032, %v1028
        %v1157 = vpack.c.b16 %v1037, %v1033
        %v1158 = vpack.c.b16 %v1038, %v1034
        %v1159 = vpack.c.b16 %v1039, %v1035
        %v1160 = vpack.c.b16 %v1040, %v1036
        %v1161 = vpack.c.b16 %v1045, %v1041
        %v1162 = vpack.c.b16 %v1046, %v1042
        %v1163 = vpack.c.b16 %v1047, %v1043
        %v1164 = vpack.c.b16 %v1048, %v1044
        %v1165 = vpack.c.b16 %v1053, %v1049
        %v1166 = vpack.c.b16 %v1054, %v1050
        %v1167 = vpack.c.b16 %v1055, %v1051
        %v1168 = vpack.c.b16 %v1056, %v1052
        %v1169 = vpack.c.b16 %v1061, %v1057
        %v1170 = vpack.c.b16 %v1062, %v1058
        %v1171 = vpack.c.b16 %v1063, %v1059
        %v1172 = vpack.c.b16 %v1064, %v1060
        %v1173 = vpack.c.b16 %v1069, %v1065
        %v1174 = vpack.c.b16 %v1070, %v1066
        %v1175 = vpack.c.b16 %v1071, %v1067
        %v1176 = vpack.c.b16 %v1072, %v1068
        %v1177 = vpack.c.b16 %v1077, %v1073
        %v1178 = vpack.c.b16 %v1078, %v1074
        %v1179 = vpack.c.b16 %v1079, %v1075
        %v1180 = vpack.c.b16 %v1080, %v1076
        %v1181 = vpack.c.b16 %v1085, %v1081
        %v1182 = vpack.c.b16 %v1086, %v1082
        %v1183 = vpack.c.b16 %v1087, %v1083
        %v1184 = vpack.c.b16 %v1088, %v1084
        %v1185 = vpack.c.b16 %v1093, %v1089
        %v1186 = vpack.c.b16 %v1094, %v1090
        %v1187 = vpack.c.b16 %v1095, %v1091
        %v1188 = vpack.c.b16 %v1096, %v1092
        %v1189 = vpack.c.b16 %v1101, %v1097
        %v1190 = vpack.c.b16 %v1102, %v1098
        %v1191 = vpack.c.b16 %v1103, %v1099
        %v1192 = vpack.c.b16 %v1104, %v1100
        %v1193 = vpack.c.b16 %v1109, %v1105
        %v1194 = vpack.c.b16 %v1110, %v1106
        %v1195 = vpack.c.b16 %v1111, %v1107
        %v1196 = vpack.c.b16 %v1112, %v1108
        %v1197 = vpack.c.b16 %v1117, %v1113
        %v1198 = vpack.c.b16 %v1118, %v1114
        %v1199 = vpack.c.b16 %v1119, %v1115
        %v1200 = vpack.c.b16 %v1120, %v1116
        %v1201 = vpack.c.b16 %v1125, %v1121
        %v1202 = vpack.c.b16 %v1126, %v1122
        %v1203 = vpack.c.b16 %v1127, %v1123
        %v1204 = vpack.c.b16 %v1128, %v1124
        %v1205 = vpack.c.b16 %v1133, %v1129
        %v1206 = vpack.c.b16 %v1134, %v1130
        %v1207 = vpack.c.b16 %v1135, %v1131
        %v1208 = vpack.c.b16 %v1136, %v1132
        %v1209 = vpack.c.b16 %v1141, %v1137
        %v1210 = vpack.c.b16 %v1142, %v1138
        %v1211 = vpack.c.b16 %v1143, %v1139
        %v1212 = vpack.c.b16 %v1144, %v1140
        %v1213 = vpack.c.b16 %v1149, %v1145
        %v1214 = vpack.c.b16 %v1150, %v1146
        %v1215 = vpack.c.b16 %v1151, %v1147
        %v1216 = vpack.c.b16 %v1152, %v1148
        %1281 = vmatprep.subr.bf16.mxu0 0
        %1282 = vmatpush1.bf16.msra.mxu0 %v865
        %1283 = vmatprep.subr.bf16.mxu0 0
        %1284 = vmatpush1.bf16.msra.mxu0 %v864
        %1285 = vmatprep.subr.bf16.mxu0 0
        %1286 = vmatpush1.bf16.msra.mxu0 %v863
        %1287 = vmatprep.subr.bf16.mxu0 0
        %1288 = vmatpush1.bf16.msra.mxu0 %v862
        %1289 = vmatprep.subr.bf16.mxu0 0
        %1290 = vmatpush1.bf16.msra.mxu0 %v861
        %1291 = vmatprep.subr.bf16.mxu0 0
        %1292 = vmatpush1.bf16.msra.mxu0 %v860
        %1293 = vmatprep.subr.bf16.mxu0 0
        %1294 = vmatpush1.bf16.msra.mxu0 %v859
        %1295 = vmatprep.subr.bf16.mxu0 0
        %1296 = vmatpush1.bf16.msra.mxu0 %v858
        %1297 = vmatprep.subr.bf16.mxu0 0
        %1298 = vmatpush2.bf16.msra.mxu0 %v873
        %1299 = vmatprep.subr.bf16.mxu0 0
        %1300 = vmatpush2.bf16.msra.mxu0 %v872
        %1301 = vmatprep.subr.bf16.mxu0 0
        %1302 = vmatpush2.bf16.msra.mxu0 %v871
        %1303 = vmatprep.subr.bf16.mxu0 0
        %1304 = vmatpush2.bf16.msra.mxu0 %v870
        %1305 = vmatprep.subr.bf16.mxu0 0
        %1306 = vmatpush2.bf16.msra.mxu0 %v869
        %1307 = vmatprep.subr.bf16.mxu0 0
        %1308 = vmatpush2.bf16.msra.mxu0 %v868
        %1309 = vmatprep.subr.bf16.mxu0 0
        %1310 = vmatpush2.bf16.msra.mxu0 %v867
        %1311 = vmatprep.subr.bf16.mxu0 0
        %1312 = vmatpush2.bf16.msra.mxu0 %v866
        %1313 = vmatprep.mubr.bf16.mxu0 %v1154
        %1314 = vmatmul.mubr.bf16.gmra.mxu0 %v1153
        %v1315 = vpop.f32.mrf.mxu0
        %v1316 = vadd.f32 %v959, %v1315
        %v1317 = vpop.f32.mrf.mxu0
        %v1318 = vpop.f32.mrf.mxu0
        %v1319 = vadd.f32 %v959, %v1318
        %v1320 = vpop.f32.mrf.mxu0
        %1321 = vmatprep.mubr.bf16.mxu0 %v1158
        %1322 = vmatmul.mubr.bf16.gmra.mxu0 %v1157
        %v1323 = vpop.f32.mrf.mxu0
        %v1324 = vadd.f32 %v959, %v1323
        %v1325 = vpop.f32.mrf.mxu0
        %v1326 = vpop.f32.mrf.mxu0
        %v1327 = vadd.f32 %v959, %v1326
        %v1328 = vpop.f32.mrf.mxu0
        %1329 = vmatprep.mubr.bf16.mxu0 %v1162
        %1330 = vmatmul.mubr.bf16.gmra.mxu0 %v1161
        %v1331 = vpop.f32.mrf.mxu0
        %v1332 = vadd.f32 %v959, %v1331
        %v1333 = vpop.f32.mrf.mxu0
        %v1334 = vpop.f32.mrf.mxu0
        %v1335 = vadd.f32 %v959, %v1334
        %v1336 = vpop.f32.mrf.mxu0
        %1337 = vmatprep.mubr.bf16.mxu0 %v1166
        %1338 = vmatmul.mubr.bf16.gmra.mxu0 %v1165
        %v1339 = vpop.f32.mrf.mxu0
        %v1340 = vadd.f32 %v959, %v1339
        %v1341 = vpop.f32.mrf.mxu0
        %v1342 = vpop.f32.mrf.mxu0
        %v1343 = vadd.f32 %v959, %v1342
        %v1344 = vpop.f32.mrf.mxu0
        %1345 = vmatprep.mubr.bf16.mxu0 %v1170
        %1346 = vmatmul.mubr.bf16.gmra.mxu0 %v1169
        %v1347 = vpop.f32.mrf.mxu0
        %v1348 = vadd.f32 %v959, %v1347
        %v1349 = vpop.f32.mrf.mxu0
        %v1350 = vpop.f32.mrf.mxu0
        %v1351 = vadd.f32 %v959, %v1350
        %v1352 = vpop.f32.mrf.mxu0
        %1353 = vmatprep.mubr.bf16.mxu0 %v1174
        %1354 = vmatmul.mubr.bf16.gmra.mxu0 %v1173
        %v1355 = vpop.f32.mrf.mxu0
        %v1356 = vadd.f32 %v959, %v1355
        %v1357 = vpop.f32.mrf.mxu0
        %v1358 = vpop.f32.mrf.mxu0
        %v1359 = vadd.f32 %v959, %v1358
        %v1360 = vpop.f32.mrf.mxu0
        %1361 = vmatprep.mubr.bf16.mxu0 %v1178
        %1362 = vmatmul.mubr.bf16.gmra.mxu0 %v1177
        %v1363 = vpop.f32.mrf.mxu0
        %v1364 = vadd.f32 %v959, %v1363
        %v1365 = vpop.f32.mrf.mxu0
        %v1366 = vpop.f32.mrf.mxu0
        %v1367 = vadd.f32 %v959, %v1366
        %v1368 = vpop.f32.mrf.mxu0
        %1369 = vmatprep.mubr.bf16.mxu0 %v1182
        %1370 = vmatmul.mubr.bf16.gmra.mxu0 %v1181
        %v1371 = vpop.f32.mrf.mxu0
        %v1372 = vadd.f32 %v959, %v1371
        %v1373 = vpop.f32.mrf.mxu0
        %v1374 = vpop.f32.mrf.mxu0
        %v1375 = vadd.f32 %v959, %v1374
        %v1376 = vpop.f32.mrf.mxu0
        %1377 = vmatprep.mubr.bf16.mxu0 %v1186
        %1378 = vmatmul.mubr.bf16.gmra.mxu0 %v1185
        %v1379 = vpop.f32.mrf.mxu0
        %v1380 = vadd.f32 %v959, %v1379
        %v1381 = vpop.f32.mrf.mxu0
        %v1382 = vpop.f32.mrf.mxu0
        %v1383 = vadd.f32 %v959, %v1382
        %v1384 = vpop.f32.mrf.mxu0
        %1385 = vmatprep.mubr.bf16.mxu0 %v1190
        %1386 = vmatmul.mubr.bf16.gmra.mxu0 %v1189
        %v1387 = vpop.f32.mrf.mxu0
        %v1388 = vadd.f32 %v959, %v1387
        %v1389 = vpop.f32.mrf.mxu0
        %v1390 = vpop.f32.mrf.mxu0
        %v1391 = vadd.f32 %v959, %v1390
        %v1392 = vpop.f32.mrf.mxu0
        %1393 = vmatprep.mubr.bf16.mxu0 %v1194
        %1394 = vmatmul.mubr.bf16.gmra.mxu0 %v1193
        %v1395 = vpop.f32.mrf.mxu0
        %v1396 = vadd.f32 %v959, %v1395
        %v1397 = vpop.f32.mrf.mxu0
        %v1398 = vpop.f32.mrf.mxu0
        %v1399 = vadd.f32 %v959, %v1398
        %v1400 = vpop.f32.mrf.mxu0
        %1401 = vmatprep.mubr.bf16.mxu0 %v1198
        %1402 = vmatmul.mubr.bf16.gmra.mxu0 %v1197
        %v1403 = vpop.f32.mrf.mxu0
        %v1404 = vadd.f32 %v959, %v1403
        %v1405 = vpop.f32.mrf.mxu0
        %v1406 = vpop.f32.mrf.mxu0
        %v1407 = vadd.f32 %v959, %v1406
        %v1408 = vpop.f32.mrf.mxu0
        %1409 = vmatprep.mubr.bf16.mxu0 %v1202
        %1410 = vmatmul.mubr.bf16.gmra.mxu0 %v1201
        %v1411 = vpop.f32.mrf.mxu0
        %v1412 = vadd.f32 %v959, %v1411
        %v1413 = vpop.f32.mrf.mxu0
        %v1414 = vpop.f32.mrf.mxu0
        %v1415 = vadd.f32 %v959, %v1414
        %v1416 = vpop.f32.mrf.mxu0
        %1417 = vmatprep.mubr.bf16.mxu0 %v1206
        %1418 = vmatmul.mubr.bf16.gmra.mxu0 %v1205
        %v1419 = vpop.f32.mrf.mxu0
        %v1420 = vadd.f32 %v959, %v1419
        %v1421 = vpop.f32.mrf.mxu0
        %v1422 = vpop.f32.mrf.mxu0
        %v1423 = vadd.f32 %v959, %v1422
        %v1424 = vpop.f32.mrf.mxu0
        %1425 = vmatprep.mubr.bf16.mxu0 %v1210
        %1426 = vmatmul.mubr.bf16.gmra.mxu0 %v1209
        %v1427 = vpop.f32.mrf.mxu0
        %v1428 = vadd.f32 %v959, %v1427
        %v1429 = vpop.f32.mrf.mxu0
        %v1430 = vpop.f32.mrf.mxu0
        %v1431 = vadd.f32 %v959, %v1430
        %v1432 = vpop.f32.mrf.mxu0
        %1433 = vmatprep.mubr.bf16.mxu0 %v1214
        %1434 = vmatmul.mubr.bf16.gmra.mxu0 %v1213
        %v1435 = vpop.f32.mrf.mxu0
        %v1436 = vadd.f32 %v959, %v1435
        %v1437 = vpop.f32.mrf.mxu0
        %v1438 = vpop.f32.mrf.mxu0
        %v1439 = vadd.f32 %v959, %v1438
        %v1440 = vpop.f32.mrf.mxu0
        %1441 = vdwg.mxu0
        %1442 = vmatprep.subr.bf16.mxu0 0
        %1443 = vmatpush1.bf16.msra.mxu0 %v881
        %1444 = vmatprep.subr.bf16.mxu0 0
        %1445 = vmatpush1.bf16.msra.mxu0 %v880
        %1446 = vmatprep.subr.bf16.mxu0 0
        %1447 = vmatpush1.bf16.msra.mxu0 %v879
        %1448 = vmatprep.subr.bf16.mxu0 0
        %1449 = vmatpush1.bf16.msra.mxu0 %v878
        %1450 = vmatprep.subr.bf16.mxu0 0
        %1451 = vmatpush1.bf16.msra.mxu0 %v877
        %1452 = vmatprep.subr.bf16.mxu0 0
        %1453 = vmatpush1.bf16.msra.mxu0 %v876
        %1454 = vmatprep.subr.bf16.mxu0 0
        %1455 = vmatpush1.bf16.msra.mxu0 %v875
        %1456 = vmatprep.subr.bf16.mxu0 0
        %1457 = vmatpush1.bf16.msra.mxu0 %v874
        %1458 = vmatprep.subr.bf16.mxu0 0
        %1459 = vmatpush2.bf16.msra.mxu0 %v889
        %1460 = vmatprep.subr.bf16.mxu0 0
        %1461 = vmatpush2.bf16.msra.mxu0 %v888
        %1462 = vmatprep.subr.bf16.mxu0 0
        %1463 = vmatpush2.bf16.msra.mxu0 %v887
        %1464 = vmatprep.subr.bf16.mxu0 0
        %1465 = vmatpush2.bf16.msra.mxu0 %v886
        %1466 = vmatprep.subr.bf16.mxu0 0
        %1467 = vmatpush2.bf16.msra.mxu0 %v885
        %1468 = vmatprep.subr.bf16.mxu0 0
        %1469 = vmatpush2.bf16.msra.mxu0 %v884
        %1470 = vmatprep.subr.bf16.mxu0 0
        %1471 = vmatpush2.bf16.msra.mxu0 %v883
        %1472 = vmatprep.subr.bf16.mxu0 0
        %1473 = vmatpush2.bf16.msra.mxu0 %v882
        %1474 = vmatprep.mubr.bf16.mxu0 %v1156
        %1475 = vmatmul.mubr.bf16.gmra.mxu0 %v1155
        %v1476 = vpop.f32.mrf.mxu0
        %v1477 = vadd.f32 %v1316, %v1476
        %v1478 = vpop.f32.mrf.mxu0
        %v1479 = vpop.f32.mrf.mxu0
        %v1480 = vadd.f32 %v1319, %v1479
        %v1481 = vpop.f32.mrf.mxu0
        %1482 = vmatprep.mubr.bf16.mxu0 %v1160
        %1483 = vmatmul.mubr.bf16.gmra.mxu0 %v1159
        %v1484 = vpop.f32.mrf.mxu0
        %v1485 = vadd.f32 %v1324, %v1484
        %v1486 = vpop.f32.mrf.mxu0
        %v1487 = vpop.f32.mrf.mxu0
        %v1488 = vadd.f32 %v1327, %v1487
        %v1489 = vpop.f32.mrf.mxu0
        %1490 = vmatprep.mubr.bf16.mxu0 %v1164
        %1491 = vmatmul.mubr.bf16.gmra.mxu0 %v1163
        %v1492 = vpop.f32.mrf.mxu0
        %v1493 = vadd.f32 %v1332, %v1492
        %v1494 = vpop.f32.mrf.mxu0
        %v1495 = vpop.f32.mrf.mxu0
        %v1496 = vadd.f32 %v1335, %v1495
        %v1497 = vpop.f32.mrf.mxu0
        %1498 = vmatprep.mubr.bf16.mxu0 %v1168
        %1499 = vmatmul.mubr.bf16.gmra.mxu0 %v1167
        %v1500 = vpop.f32.mrf.mxu0
        %v1501 = vadd.f32 %v1340, %v1500
        %v1502 = vpop.f32.mrf.mxu0
        %v1503 = vpop.f32.mrf.mxu0
        %v1504 = vadd.f32 %v1343, %v1503
        %v1505 = vpop.f32.mrf.mxu0
        %1506 = vmatprep.mubr.bf16.mxu0 %v1172
        %1507 = vmatmul.mubr.bf16.gmra.mxu0 %v1171
        %v1508 = vpop.f32.mrf.mxu0
        %v1509 = vadd.f32 %v1348, %v1508
        %v1510 = vpop.f32.mrf.mxu0
        %v1511 = vpop.f32.mrf.mxu0
        %v1512 = vadd.f32 %v1351, %v1511
        %v1513 = vpop.f32.mrf.mxu0
        %1514 = vmatprep.mubr.bf16.mxu0 %v1176
        %1515 = vmatmul.mubr.bf16.gmra.mxu0 %v1175
        %v1516 = vpop.f32.mrf.mxu0
        %v1517 = vadd.f32 %v1356, %v1516
        %v1518 = vpop.f32.mrf.mxu0
        %v1519 = vpop.f32.mrf.mxu0
        %v1520 = vadd.f32 %v1359, %v1519
        %v1521 = vpop.f32.mrf.mxu0
        %1522 = vmatprep.mubr.bf16.mxu0 %v1180
        %1523 = vmatmul.mubr.bf16.gmra.mxu0 %v1179
        %v1524 = vpop.f32.mrf.mxu0
        %v1525 = vadd.f32 %v1364, %v1524
        %v1526 = vpop.f32.mrf.mxu0
        %v1527 = vpop.f32.mrf.mxu0
        %v1528 = vadd.f32 %v1367, %v1527
        %v1529 = vpop.f32.mrf.mxu0
        %1530 = vmatprep.mubr.bf16.mxu0 %v1184
        %1531 = vmatmul.mubr.bf16.gmra.mxu0 %v1183
        %v1532 = vpop.f32.mrf.mxu0
        %v1533 = vadd.f32 %v1372, %v1532
        %v1534 = vpop.f32.mrf.mxu0
        %v1535 = vpop.f32.mrf.mxu0
        %v1536 = vadd.f32 %v1375, %v1535
        %v1537 = vpop.f32.mrf.mxu0
        %1538 = vmatprep.mubr.bf16.mxu0 %v1188
        %1539 = vmatmul.mubr.bf16.gmra.mxu0 %v1187
        %v1540 = vpop.f32.mrf.mxu0
        %v1541 = vadd.f32 %v1380, %v1540
        %v1542 = vpop.f32.mrf.mxu0
        %v1543 = vpop.f32.mrf.mxu0
        %v1544 = vadd.f32 %v1383, %v1543
        %v1545 = vpop.f32.mrf.mxu0
        %1546 = vmatprep.mubr.bf16.mxu0 %v1192
        %1547 = vmatmul.mubr.bf16.gmra.mxu0 %v1191
        %v1548 = vpop.f32.mrf.mxu0
        %v1549 = vadd.f32 %v1388, %v1548
        %v1550 = vpop.f32.mrf.mxu0
        %v1551 = vpop.f32.mrf.mxu0
        %v1552 = vadd.f32 %v1391, %v1551
        %v1553 = vpop.f32.mrf.mxu0
        %1554 = vmatprep.mubr.bf16.mxu0 %v1196
        %1555 = vmatmul.mubr.bf16.gmra.mxu0 %v1195
        %v1556 = vpop.f32.mrf.mxu0
        %v1557 = vadd.f32 %v1396, %v1556
        %v1558 = vpop.f32.mrf.mxu0
        %v1559 = vpop.f32.mrf.mxu0
        %v1560 = vadd.f32 %v1399, %v1559
        %v1561 = vpop.f32.mrf.mxu0
        %1562 = vmatprep.mubr.bf16.mxu0 %v1200
        %1563 = vmatmul.mubr.bf16.gmra.mxu0 %v1199
        %v1564 = vpop.f32.mrf.mxu0
        %v1565 = vadd.f32 %v1404, %v1564
        %v1566 = vpop.f32.mrf.mxu0
        %v1567 = vpop.f32.mrf.mxu0
        %v1568 = vadd.f32 %v1407, %v1567
        %v1569 = vpop.f32.mrf.mxu0
        %1570 = vmatprep.mubr.bf16.mxu0 %v1204
        %1571 = vmatmul.mubr.bf16.gmra.mxu0 %v1203
        %v1572 = vpop.f32.mrf.mxu0
        %v1573 = vadd.f32 %v1412, %v1572
        %v1574 = vpop.f32.mrf.mxu0
        %v1575 = vpop.f32.mrf.mxu0
        %v1576 = vadd.f32 %v1415, %v1575
        %v1577 = vpop.f32.mrf.mxu0
        %1578 = vmatprep.mubr.bf16.mxu0 %v1208
        %1579 = vmatmul.mubr.bf16.gmra.mxu0 %v1207
        %v1580 = vpop.f32.mrf.mxu0
        %v1581 = vadd.f32 %v1420, %v1580
        %v1582 = vpop.f32.mrf.mxu0
        %v1583 = vpop.f32.mrf.mxu0
        %v1584 = vadd.f32 %v1423, %v1583
        %v1585 = vpop.f32.mrf.mxu0
        %1586 = vmatprep.mubr.bf16.mxu0 %v1212
        %1587 = vmatmul.mubr.bf16.gmra.mxu0 %v1211
        %v1588 = vpop.f32.mrf.mxu0
        %v1589 = vadd.f32 %v1428, %v1588
        %v1590 = vpop.f32.mrf.mxu0
        %v1591 = vpop.f32.mrf.mxu0
        %v1592 = vadd.f32 %v1431, %v1591
        %v1593 = vpop.f32.mrf.mxu0
        %1594 = vmatprep.mubr.bf16.mxu0 %v1216
        %1595 = vmatmul.mubr.bf16.gmra.mxu0 %v1215
        %v1596 = vpop.f32.mrf.mxu0
        %v1597 = vadd.f32 %v1436, %v1596
        %v1598 = vpop.f32.mrf.mxu0
        %v1599 = vpop.f32.mrf.mxu0
        %v1600 = vadd.f32 %v1439, %v1599
        %v1601 = vpop.f32.mrf.mxu0
        %1602 = vdwg.mxu0
        %v1603 = vmax.f32 %v1477, 0.0
        %v1604 = vmax.f32 %v1480, 0.0
        %v1605 = vmax.f32 %v1485, 0.0
        %v1606 = vmax.f32 %v1488, 0.0
        %v1607 = vmax.f32 %v1493, 0.0
        %v1608 = vmax.f32 %v1496, 0.0
        %v1609 = vmax.f32 %v1501, 0.0
        %v1610 = vmax.f32 %v1504, 0.0
        %v1611 = vmax.f32 %v1509, 0.0
        %v1612 = vmax.f32 %v1512, 0.0
        %v1613 = vmax.f32 %v1517, 0.0
        %v1614 = vmax.f32 %v1520, 0.0
        %v1615 = vmax.f32 %v1525, 0.0
        %v1616 = vmax.f32 %v1528, 0.0
        %v1617 = vmax.f32 %v1533, 0.0
        %v1618 = vmax.f32 %v1536, 0.0
        %v1619 = vmax.f32 %v1541, 0.0
        %v1620 = vmax.f32 %v1544, 0.0
        %v1621 = vmax.f32 %v1549, 0.0
        %v1622 = vmax.f32 %v1552, 0.0
        %v1623 = vmax.f32 %v1557, 0.0
        %v1624 = vmax.f32 %v1560, 0.0
        %v1625 = vmax.f32 %v1565, 0.0
        %v1626 = vmax.f32 %v1568, 0.0
        %v1627 = vmax.f32 %v1573, 0.0
        %v1628 = vmax.f32 %v1576, 0.0
        %v1629 = vmax.f32 %v1581, 0.0
        %v1630 = vmax.f32 %v1584, 0.0
        %v1631 = vmax.f32 %v1589, 0.0
        %v1632 = vmax.f32 %v1592, 0.0
        %v1633 = vmax.f32 %v1597, 0.0
        %v1634 = vmax.f32 %v1600, 0.0
        %v1635 = vpack.c.bf16 %v1604, %v1603
        %v1636 = vpack.c.bf16 %v1606, %v1605
        %v1637 = vpack.c.bf16 %v1608, %v1607
        %v1638 = vpack.c.bf16 %v1610, %v1609
        %v1639 = vpack.c.bf16 %v1612, %v1611
        %v1640 = vpack.c.bf16 %v1614, %v1613
        %v1641 = vpack.c.bf16 %v1616, %v1615
        %v1642 = vpack.c.bf16 %v1618, %v1617
        %v1643 = vpack.c.bf16 %v1620, %v1619
        %v1644 = vpack.c.bf16 %v1622, %v1621
        %v1645 = vpack.c.bf16 %v1624, %v1623
        %v1646 = vpack.c.bf16 %v1626, %v1625
        %v1647 = vpack.c.bf16 %v1628, %v1627
        %v1648 = vpack.c.bf16 %v1630, %v1629
        %v1649 = vpack.c.bf16 %v1632, %v1631
        %v1650 = vpack.c.bf16 %v1634, %v1633
        %v1667 = vunpack.c.l.b16 %v1635
        %v1668 = vunpack.c.h.b16 %v1635
        %v1669 = vunpack.c.l.b16 %v1636
        %v1670 = vunpack.c.h.b16 %v1636
        %v1671 = vunpack.c.l.b16 %v1637
        %v1672 = vunpack.c.h.b16 %v1637
        %v1673 = vunpack.c.l.b16 %v1638
        %v1674 = vunpack.c.h.b16 %v1638
        %v1675 = vunpack.c.l.b16 %v1639
        %v1676 = vunpack.c.h.b16 %v1639
        %v1677 = vunpack.c.l.b16 %v1640
        %v1678 = vunpack.c.h.b16 %v1640
        %v1679 = vunpack.c.l.b16 %v1641
        %v1680 = vunpack.c.h.b16 %v1641
        %v1681 = vunpack.c.l.b16 %v1642
        %v1682 = vunpack.c.h.b16 %v1642
        %v1683 = vunpack.c.l.b16 %v1643
        %v1684 = vunpack.c.h.b16 %v1643
        %v1685 = vunpack.c.l.b16 %v1644
        %v1686 = vunpack.c.h.b16 %v1644
        %v1687 = vunpack.c.l.b16 %v1645
        %v1688 = vunpack.c.h.b16 %v1645
        %v1689 = vunpack.c.l.b16 %v1646
        %v1690 = vunpack.c.h.b16 %v1646
        %v1691 = vunpack.c.l.b16 %v1647
        %v1692 = vunpack.c.h.b16 %v1647
        %v1693 = vunpack.c.l.b16 %v1648
        %v1694 = vunpack.c.h.b16 %v1648
        %v1695 = vunpack.c.l.b16 %v1649
        %v1696 = vunpack.c.h.b16 %v1649
        %v1697 = vunpack.c.l.b16 %v1650
        %v1698 = vunpack.c.h.b16 %v1650
        %v1699 = vpack.c.b16 %v1667, %v1667
        %v1700 = vpack.c.b16 %v1668, %v1668
        %v1701 = vpack.c.b16 %v1669, %v1669
        %v1702 = vpack.c.b16 %v1670, %v1670
        %v1703 = vpack.c.b16 %v1671, %v1671
        %v1704 = vpack.c.b16 %v1672, %v1672
        %v1705 = vpack.c.b16 %v1673, %v1673
        %v1706 = vpack.c.b16 %v1674, %v1674
        %v1707 = vpack.c.b16 %v1675, %v1675
        %v1708 = vpack.c.b16 %v1676, %v1676
        %v1709 = vpack.c.b16 %v1677, %v1677
        %v1710 = vpack.c.b16 %v1678, %v1678
        %v1711 = vpack.c.b16 %v1679, %v1679
        %v1712 = vpack.c.b16 %v1680, %v1680
        %v1713 = vpack.c.b16 %v1681, %v1681
        %v1714 = vpack.c.b16 %v1682, %v1682
        %v1715 = vpack.c.b16 %v1683, %v1683
        %v1716 = vpack.c.b16 %v1684, %v1684
        %v1717 = vpack.c.b16 %v1685, %v1685
        %v1718 = vpack.c.b16 %v1686, %v1686
        %v1719 = vpack.c.b16 %v1687, %v1687
        %v1720 = vpack.c.b16 %v1688, %v1688
        %v1721 = vpack.c.b16 %v1689, %v1689
        %v1722 = vpack.c.b16 %v1690, %v1690
        %v1723 = vpack.c.b16 %v1691, %v1691
        %v1724 = vpack.c.b16 %v1692, %v1692
        %v1725 = vpack.c.b16 %v1693, %v1693
        %v1726 = vpack.c.b16 %v1694, %v1694
        %v1727 = vpack.c.b16 %v1695, %v1695
        %v1728 = vpack.c.b16 %v1696, %v1696
        %v1729 = vpack.c.b16 %v1697, %v1697
        %v1730 = vpack.c.b16 %v1698, %v1698
        %1763 = vst [vmem:[%s245] sm:$0xf] %v1699
        %1764 = vst [vmem:[%s245 + $0x4] sm:$0xf] %v1700
        %1765 = vst [vmem:[%s245 + $0x8] sm:$0xf] %v1701
        %1766 = vst [vmem:[%s245 + $0xc] sm:$0xf] %v1702
        %1767 = vst [vmem:[%s245 + $0x10] sm:$0xf] %v1703
        %1768 = vst [vmem:[%s245 + $0x14] sm:$0xf] %v1704
        %1769 = vst [vmem:[%s245 + $0x18] sm:$0xf] %v1705
        %1770 = vst [vmem:[%s245 + $0x1c] sm:$0xf] %v1706
        %1771 = vst [vmem:[%s245 + $0x20] sm:$0xf] %v1707
        %1772 = vst [vmem:[%s245 + $0x24] sm:$0xf] %v1708
        %1773 = vst [vmem:[%s245 + $0x28] sm:$0xf] %v1709
        %1774 = vst [vmem:[%s245 + $0x2c] sm:$0xf] %v1710
        %1775 = vst [vmem:[%s245 + $0x30] sm:$0xf] %v1711
        %1776 = vst [vmem:[%s245 + $0x34] sm:$0xf] %v1712
        %1777 = vst [vmem:[%s245 + $0x38] sm:$0xf] %v1713
        %1778 = vst [vmem:[%s245 + $0x3c] sm:$0xf] %v1714
        %1779 = vst [vmem:[%s245 + $0x40] sm:$0xf] %v1715
        %1780 = vst [vmem:[%s245 + $0x44] sm:$0xf] %v1716
        %1781 = vst [vmem:[%s245 + $0x48] sm:$0xf] %v1717
        %1782 = vst [vmem:[%s245 + $0x4c] sm:$0xf] %v1718
        %1783 = vst [vmem:[%s245 + $0x50] sm:$0xf] %v1719
        %1784 = vst [vmem:[%s245 + $0x54] sm:$0xf] %v1720
        %1785 = vst [vmem:[%s245 + $0x58] sm:$0xf] %v1721
        %1786 = vst [vmem:[%s245 + $0x5c] sm:$0xf] %v1722
        %1787 = vst [vmem:[%s245 + $0x60] sm:$0xf] %v1723
        %1788 = vst [vmem:[%s245 + $0x64] sm:$0xf] %v1724
        %1789 = vst [vmem:[%s245 + $0x68] sm:$0xf] %v1725
        %1790 = vst [vmem:[%s245 + $0x6c] sm:$0xf] %v1726
        %1791 = vst [vmem:[%s245 + $0x70] sm:$0xf] %v1727
        %1792 = vst [vmem:[%s245 + $0x74] sm:$0xf] %v1728
        %1793 = vst [vmem:[%s245 + $0x78] sm:$0xf] %v1729
        %1794 = vst [vmem:[%s245 + $0x7c] sm:$0xf] %v1730
        %s1795 = sand.u32 %s119, 1
        %s1796 = scalar_lea.sflag [#allocation4], %s1795
        %s1797 = sand.u32 %s119, 1
        %s1798 = smul.addr %s1797, 128
        %s1799 = scalar_lea.vmem [#allocation8], %s1798
        // Predicated region
        $region49: #{tpu_custom_call.1} parent=35 // pred_check
          %p1800 = pneg %p129
        $region50: #{tpu_custom_call.1} parent=35 // pred_check_branch
          %1802 = sbr.rel (%p1800) target = $region52
        $region51: #{tpu_custom_call.1} parent=35 // pred_region
          %s1803 = smul.u32 32, %s22
          %s1805 = ssub.s32 2048, 2048
          %1806 = vsyncadd %s1796, %s1805
          %s1807 = smul.addr %s1803, 64
          %s1808 = scalar_lea.hbm %s4, %s1807
          %s1809 = sshll.u32 %s1799, 4
          %s1810 = int_to_ptr.vmem [resolvable:$true] %s1809
          %1815 = dma.vmem_to_hbm [thread:$0]  %s1810, 2048, %s1808, %s1796, 64, 64, 4
        $region52: #{tpu_custom_call.1} parent=35 // pred_fallthru
          _
      $region36: #{tpu_custom_call.1} parent=5 // pred_fallthru
        _
      %p1816 = scmp.le.s32.totalorder 2, %s17
      // Predicated region
      $region53: #{tpu_custom_call.1} parent=5 // pred_check
        %p1817 = pneg %p1816
      $region54: #{tpu_custom_call.1} parent=5 // pred_check_branch
        %1819 = sbr.rel (%p1817) target = $region56
      $region55: #{tpu_custom_call.1} parent=5 // pred_region
        %s1820 = ssub.s32 %s17, 2
        // Predicated region
        $region57: #{tpu_custom_call.1} parent=55 // pred_check
          %p1821 = pneg %p135
        $region58: #{tpu_custom_call.1} parent=55 // pred_check_branch
          %1823 = sbr.rel (%p1821) target = $region60
        $region59: #{tpu_custom_call.1} parent=55 // pred_region
          %s1824 = sand.u32 %s120, 1
          %s1825 = scalar_lea.sflag [#allocation4], %s1824
          %s1826 = sand.u32 %s120, 1
          %s1827 = smul.addr %s1826, 128
          %s1828 = scalar_lea.vmem [#allocation8], %s1827
          %1829 = dma.done %s1825, 2048
        $region60: #{tpu_custom_call.1} parent=55 // pred_fallthru
          _
      $region56: #{tpu_custom_call.1} parent=5 // pred_fallthru
        _
    $region6: #{tpu_custom_call.1} parent=1 // loop_footer
      %s21 = sadd.s32 1, %s17
    $region7: #{tpu_custom_call.1} parent=1 // loop_footer_branch
      %16 = sbr.rel target = $region3
    $region8: #{tpu_custom_call.1} parent=1 // loop_exit
      _
    %1830 = vsyncpa [#allocation3], 1
    %s1831 = scalar_lea.sflag [#allocation3], 1
    %1832 = vsyncpa %s1831, 1
    %1833 = vsyncpa [#allocation6], 1
    %1834 = vsyncpa [#allocation4], 1
    %s1835 = scalar_lea.sflag [#allocation4], 1
    %1836 = vsyncpa %s1835, 1

</llo_original>
